<compile_context>
chip_gen: v5e
topology: v5e:2x2
jax: 0.10.0
libtpu: 0.0.40
codegen_flags: <defaults>
</compile_context>

<pallas_src>
import functools
import math

import jax
import jax.numpy as jnp
from jax import lax
from jax.experimental import pallas as pl
from jax.experimental.pallas import tpu as pltpu


# ----------------------------- Pallas kernels ------------------------------

def _bert_encoder_kernel(mask_ref, x_ref, embg_ref, embb_ref,
                         wqkv_ref, bqkv_ref, wo_ref, bo_ref,
                         ln1g_ref, ln1b_ref, w1_ref, b1_ref,
                         w2_ref, b2_ref, ln2g_ref, ln2b_ref,
                         h_ref, *, B, S, nH, Dh, eps, scale):
    """One fused BERT encoder layer per grid step; hidden state resident in h_ref."""
    H = nH * Dh
    layer = pl.program_id(0)

    def layernorm(y, g, b):
        mu = jnp.mean(y, axis=-1, keepdims=True)
        var = jnp.mean(jnp.square(y - mu), axis=-1, keepdims=True)
        return (y - mu) * lax.rsqrt(var + eps) * g + b

    @pl.when(layer == 0)
    def _():
        # embedding LayerNorm fused into the first grid step (no zero-residual DMA).
        h_ref[...] = layernorm(x_ref[...], embg_ref[...], embb_ref[...])

    h = h_ref[...]                                         # (B*S, H) f32, VMEM-resident

    # ---- fused QKV projection: one MXU pass over (H, 3H) bf16 weights ----
    qkv = jnp.dot(h.astype(jnp.bfloat16), wqkv_ref[0],
                  preferred_element_type=jnp.float32) + bqkv_ref[0]   # (B*S, 3H) f32

    # additive mask built in-kernel from the (B, S) attention mask
    addm = ((1.0 - mask_ref[...]) * -10000.0)[:, None, :]  # (B, 1, S)

    # ---- per-head attention; heads = static lane slices of H (unrolled) ----
    ctx_heads = []
    for hh in range(nH):
        qh = qkv[:, hh * Dh:(hh + 1) * Dh].reshape(B, S, Dh)
        kh = qkv[:, H + hh * Dh:H + (hh + 1) * Dh].reshape(B, S, Dh)
        vh = qkv[:, 2 * H + hh * Dh:2 * H + (hh + 1) * Dh].reshape(B, S, Dh)
        s = jnp.einsum("bqd,bkd->bqk", qh, kh,
                       preferred_element_type=jnp.float32) * scale + addm
        s = s - jnp.max(s, axis=-1, keepdims=True)
        p = jnp.exp(s)
        p = p * pl.reciprocal(jnp.sum(p, axis=-1, keepdims=True), approx=True)
        ctx = jnp.einsum("bqk,bkd->bqd", p, vh,
                         preferred_element_type=jnp.float32)
        ctx_heads.append(ctx.reshape(B * S, Dh))
    ctx = jnp.concatenate(ctx_heads, axis=-1)              # (B*S, H), merge_heads in-kernel

    # ---- attention output projection + residual + LayerNorm ----
    attn_out = jnp.dot(ctx.astype(jnp.bfloat16), wo_ref[0],
                       preferred_element_type=jnp.float32) + bo_ref[0]
    h1 = layernorm(attn_out + h, ln1g_ref[0], ln1b_ref[0])

    # ---- feed-forward (GELU) + residual + LayerNorm ----
    inter = jnp.dot(h1.astype(jnp.bfloat16), w1_ref[0],
                    preferred_element_type=jnp.float32) + b1_ref[0]
    # TODO(synk): HF BERT uses exact erf-GELU; tanh-approx GELU used here (EUP-friendly).
    inter = 0.5 * inter * (1.0 + jnp.tanh(0.7978845608028654 *
                                          (inter + 0.044715 * inter * inter * inter)))
    ffn = jnp.dot(inter.astype(jnp.bfloat16), w2_ref[0],
                  preferred_element_type=jnp.float32) + b2_ref[0]
    h_ref[...] = layernorm(ffn + h1, ln2g_ref[0], ln2b_ref[0])


def _head_kernel(cls_ref, wp_ref, bp_ref, wc_ref, bc_ref, lab_ref,
                 logits_ref, nll_ref):
    """pooler(tanh dense) + classifier + per-example cross-entropy, fused."""
    pooled = jnp.tanh(
        jnp.dot(cls_ref[...].astype(jnp.bfloat16), wp_ref[...],
                preferred_element_type=jnp.float32) + bp_ref[...])
    logits = jnp.dot(pooled.astype(jnp.bfloat16), wc_ref[...],
                     preferred_element_type=jnp.float32) + bc_ref[...]
    logits_ref[...] = logits

    z = logits - jnp.max(logits, axis=-1, keepdims=True)
    lse = jnp.log(jnp.sum(jnp.exp(z), axis=-1, keepdims=True))
    Bc, C = logits.shape
    onehot = (lax.broadcasted_iota(jnp.int32, (Bc, C), 1)
              == lab_ref[...]).astype(jnp.float32)          # in-kernel one-hot
    nll_ref[...] = -jnp.sum(onehot * (z - lse), axis=-1, keepdims=True)


# --------------------------- pallas_call wrappers ---------------------------

def pallas_bert_encoder(x2, mask_f, params, cfg, B, S):
    H, nH, I, L = cfg["hidden"], cfg["heads"], cfg["intermediate"], cfg["layers"]
    Dh = H // nH

    def stack(name, dtype=jnp.float32, as_row=False):
        arrs = [lyr[name] for lyr in params["layers"]]
        if as_row:
            arrs = [a[None, :] for a in arrs]
        return jnp.stack(arrs).astype(dtype)

    # stacked per-layer weights: leading "layer" dim streamed by the grid
    wqkv = jnp.stack([jnp.concatenate([l["wq"], l["wk"], l["wv"]], axis=1)
                      for l in params["layers"]]).astype(jnp.bfloat16)      # (L, H, 3H)
    bqkv = jnp.stack([jnp.concatenate([l["bq"], l["bk"], l["bv"]])[None, :]
                      for l in params["layers"]])                           # (L, 1, 3H)
    wo = stack("wo", jnp.bfloat16)
    bo = stack("bo", as_row=True)
    ln1g = stack("ln1_g", as_row=True)
    ln1b = stack("ln1_b", as_row=True)
    w1 = stack("w1", jnp.bfloat16)
    b1 = stack("b1", as_row=True)
    w2 = stack("w2", jnp.bfloat16)
    b2 = stack("b2", as_row=True)
    ln2g = stack("ln2_g", as_row=True)
    ln2b = stack("ln2_b", as_row=True)

    embg = params["emb_ln_g"][None, :]
    embb = params["emb_ln_b"][None, :]

    def const_spec(shape):
        nd = len(shape)
        return pl.BlockSpec(shape, lambda l, _nd=nd: (0,) * _nd)

    def per_layer_spec(shape):  # shape = (L, a, b) -> block (1, a, b)
        return pl.BlockSpec((1,) + shape[1:], lambda l: (l, 0, 0))

    kernel = functools.partial(_bert_encoder_kernel, B=B, S=S, nH=nH, Dh=Dh,
                               eps=1e-12, scale=1.0 / math.sqrt(Dh))

    return pl.pallas_call(
        kernel,
        grid=(L,),
        in_specs=[
            const_spec((B, S)),            # attention mask (additive form built in-kernel)
            const_spec((B * S, H)),        # raw embeddings
            const_spec((1, H)),            # emb LN gamma
            const_spec((1, H)),            # emb LN beta
            per_layer_spec(wqkv.shape),
            per_layer_spec(bqkv.shape),
            per_layer_spec(wo.shape),
            per_layer_spec(bo.shape),
            per_layer_spec(ln1g.shape),
            per_layer_spec(ln1b.shape),
            per_layer_spec(w1.shape),
            per_layer_spec(b1.shape),
            per_layer_spec(w2.shape),
            per_layer_spec(b2.shape),
            per_layer_spec(ln2g.shape),
            per_layer_spec(ln2b.shape),
        ],
        out_specs=pl.BlockSpec((B * S, H), lambda l: (0, 0)),   # resident across layers
        out_shape=jax.ShapeDtypeStruct((B * S, H), jnp.float32),
        compiler_params=pltpu.CompilerParams(
            dimension_semantics=("arbitrary",)),
    )(mask_f, x2, embg, embb, wqkv, bqkv, wo, bo,
      ln1g, ln1b, w1, b1, w2, b2, ln2g, ln2b)


def pallas_bert_head(cls, wp, bp, wc, bc, labels2):
    B, H = cls.shape
    C = wc.shape[1]
    return pl.pallas_call(
        _head_kernel,
        grid=(1,),
        in_specs=[
            pl.BlockSpec((B, H), lambda i: (0, 0)),
            pl.BlockSpec((H, H), lambda i: (0, 0)),
            pl.BlockSpec((1, H), lambda i: (0, 0)),
            pl.BlockSpec((H, C), lambda i: (0, 0)),
            pl.BlockSpec((1, C), lambda i: (0, 0)),
            pl.BlockSpec((B, 1), lambda i: (0, 0)),
        ],
        out_specs=(pl.BlockSpec((B, C), lambda i: (0, 0)),
                   pl.BlockSpec((B, 1), lambda i: (0, 0))),
        out_shape=(jax.ShapeDtypeStruct((B, C), jnp.float32),
                   jax.ShapeDtypeStruct((B, 1), jnp.float32)),
    )(cls, wp.astype(jnp.bfloat16), bp[None, :],
      wc.astype(jnp.bfloat16), bc[None, :], labels2)


# --------------------------- parameters (synthetic) -------------------------

CFG = dict(vocab=128, max_pos=16, hidden=32, heads=4, intermediate=128,
           layers=2, num_labels=3)


def init_params(key, cfg):
    def nrm(k, shape):
        return 0.02 * jax.random.normal(k, shape, jnp.float32)

    H, I = cfg["hidden"], cfg["intermediate"]
    keys = iter(jax.random.split(key, 64))
    params = {
        "word_emb": nrm(next(keys), (cfg["vocab"], H)),
        "pos_emb": nrm(next(keys), (cfg["max_pos"], H)),
        "type_emb": nrm(next(keys), (2, H)),
        "emb_ln_g": jnp.ones((H,), jnp.float32),
        "emb_ln_b": jnp.zeros((H,), jnp.float32),
        "layers": [],
        "wp": nrm(next(keys), (H, H)), "bp": jnp.zeros((H,), jnp.float32),
        "wc": nrm(next(keys), (H, cfg["num_labels"])),
        "bc": jnp.zeros((cfg["num_labels"],), jnp.float32),
    }
    for _ in range(cfg["layers"]):
        params["layers"].append({
            "wq": nrm(next(keys), (H, H)), "bq": jnp.zeros((H,), jnp.float32),
            "wk": nrm(next(keys), (H, H)), "bk": jnp.zeros((H,), jnp.float32),
            "wv": nrm(next(keys), (H, H)), "bv": jnp.zeros((H,), jnp.float32),
            "wo": nrm(next(keys), (H, H)), "bo": jnp.zeros((H,), jnp.float32),
            "ln1_g": jnp.ones((H,), jnp.float32), "ln1_b": jnp.zeros((H,), jnp.float32),
            "w1": nrm(next(keys), (H, I)), "b1": jnp.zeros((I,), jnp.float32),
            "w2": nrm(next(keys), (I, H)), "b2": jnp.zeros((H,), jnp.float32),
            "ln2_g": jnp.ones((H,), jnp.float32), "ln2_b": jnp.zeros((H,), jnp.float32),
        })
    return params


# ------------------------------ forward pass --------------------------------

def custom_bert_forward(params, input_ids, attention_mask, labels=None, cfg=CFG):
    B, S = input_ids.shape
    H = cfg["hidden"]

    # --- embeddings (gather = JAX glue; LayerNorm is fused into the encoder kernel) ---
    x = jnp.take(params["word_emb"], input_ids, axis=0)              # (B, S, H)
    x = x + params["pos_emb"][:S][None, :, :]
    # TODO(synk): token_type_ids assumed all-zero (HF default when not provided).
    x = x + params["type_emb"][0][None, None, :]
    x2 = x.reshape(B * S, H)

    # --- fused encoder: embedding-LN + all transformer layers in ONE pallas_call ---
    h = pallas_bert_encoder(x2, attention_mask.astype(jnp.float32), params, cfg, B, S)

    # --- fused pooler + classifier + cross-entropy epilogue ---
    cls = h.reshape(B, S, H)[:, 0, :]                                # (B, H)
    if labels is not None:
        lab2 = labels.reshape(B, 1).astype(jnp.int32)
    else:
        lab2 = jnp.zeros((B, 1), jnp.int32)
    logits, nll = pallas_bert_head(cls, params["wp"], params["bp"],
                                   params["wc"], params["bc"], lab2)

    loss = jnp.mean(nll) if labels is not None else None             # CrossEntropyLoss (mean)
    return {"loss": loss, "logits": logits}


# ---------------------------------- main -------------------------------------

if __name__ == "__main__":
    key = jax.random.PRNGKey(0)
    kp, kid, klb = jax.random.split(key, 3)

    B, S = 2, 8
    params = init_params(kp, CFG)
    input_ids = jax.random.randint(kid, (B, S), 0, CFG["vocab"], dtype=jnp.int32)
    attention_mask = jnp.array([[1, 1, 1, 1, 1, 1, 1, 1],
                                [1, 1, 1, 1, 1, 1, 0, 0]], dtype=jnp.int32)
    labels = jax.random.randint(klb, (B,), 0, CFG["num_labels"], dtype=jnp.int32)

    fwd = jax.jit(functools.partial(custom_bert_forward, cfg=CFG))
    out = fwd(params, input_ids, attention_mask, labels)
    jax.block_until_ready(out["logits"])
    jax.block_until_ready(out["loss"])
    assert out["logits"].shape == (B, CFG["num_labels"])
    assert out["loss"].shape == ()
    print("KERNEL_OK")
</pallas_src>

<mosaic_0001>
module attributes {stable_mosaic.version = 11 : i64} {
  func.func @_head_kernel(%arg0: i32, %arg1: memref<2x32xf32, #tpu.memory_space<vmem>>, %arg2: memref<32x32xbf16, #tpu.memory_space<vmem>>, %arg3: memref<1x32xf32, #tpu.memory_space<vmem>>, %arg4: memref<32x3xbf16, #tpu.memory_space<vmem>>, %arg5: memref<1x3xf32, #tpu.memory_space<vmem>>, %arg6: memref<2x1xi32, #tpu.memory_space<vmem>>, %arg7: memref<2x3xf32, #tpu.memory_space<vmem>>, %arg8: memref<2x1xf32, #tpu.memory_space<vmem>>) attributes {dimension_semantics = [#tpu.dimension_semantics<arbitrary>], iteration_bounds = array<i64: 1>, scalar_prefetch = 0 : i64, scratch_operands = 0 : i64, tpu.core_type = #tpu.core_type<tc>, window_params = [{pipeline_mode = #tpu.pipeline_mode<synchronous>, transform_indices = @transform_0, window_bounds = array<i64: 2, 32>}, {pipeline_mode = #tpu.pipeline_mode<synchronous>, transform_indices = @transform_1, window_bounds = array<i64: 32, 32>}, {pipeline_mode = #tpu.pipeline_mode<synchronous>, transform_indices = @transform_2, window_bounds = array<i64: 1, 32>}, {pipeline_mode = #tpu.pipeline_mode<synchronous>, transform_indices = @transform_3, window_bounds = array<i64: 32, 3>}, {pipeline_mode = #tpu.pipeline_mode<synchronous>, transform_indices = @transform_4, window_bounds = array<i64: 1, 3>}, {pipeline_mode = #tpu.pipeline_mode<synchronous>, transform_indices = @transform_5, window_bounds = array<i64: 2, 1>}, {pipeline_mode = #tpu.pipeline_mode<synchronous>, transform_indices = @transform_6, window_bounds = array<i64: 2, 3>}, {pipeline_mode = #tpu.pipeline_mode<synchronous>, transform_indices = @transform_7, window_bounds = array<i64: 2, 1>}]} {
    %c0 = arith.constant 0 : index
    %c0_0 = arith.constant 0 : index
    %0 = vector.load %arg1[%c0, %c0_0] : memref<2x32xf32, #tpu.memory_space<vmem>>, vector<2x32xf32>
    %1 = arith.truncf %0 : vector<2x32xf32> to vector<2x32xbf16>
    %c0_1 = arith.constant 0 : index
    %c0_2 = arith.constant 0 : index
    %2 = vector.load %arg2[%c0_1, %c0_2] : memref<32x32xbf16, #tpu.memory_space<vmem>>, vector<32x32xbf16>
    %cst = arith.constant dense<0.000000e+00> : vector<2x32xf32>
    %3 = tpu.matmul %1, %2, %cst {dimension_numbers = #tpu.dot_dimension_numbers<[1], [0], [0], [1], [0, 0, 1, 1], [], []>} : vector<2x32xbf16>, vector<32x32xbf16>, vector<2x32xf32> -> vector<2x32xf32>
    %c0_3 = arith.constant 0 : index
    %c0_4 = arith.constant 0 : index
    %4 = vector.load %arg3[%c0_3, %c0_4] : memref<1x32xf32, #tpu.memory_space<vmem>>, vector<1x32xf32>
    %5 = vector.broadcast %4 : vector<1x32xf32> to vector<2x32xf32>
    %6 = arith.addf %3, %5 : vector<2x32xf32>
    %7 = math.tanh %6 : vector<2x32xf32>
    %8 = arith.truncf %7 : vector<2x32xf32> to vector<2x32xbf16>
    %c0_5 = arith.constant 0 : index
    %c0_6 = arith.constant 0 : index
    %9 = vector.load %arg4[%c0_5, %c0_6] : memref<32x3xbf16, #tpu.memory_space<vmem>>, vector<32x3xbf16>
    %cst_7 = arith.constant dense<0.000000e+00> : vector<2x3xf32>
    %10 = tpu.matmul %8, %9, %cst_7 {dimension_numbers = #tpu.dot_dimension_numbers<[1], [0], [0], [1], [0, 0, 1, 1], [], []>} : vector<2x32xbf16>, vector<32x3xbf16>, vector<2x3xf32> -> vector<2x3xf32>
    %c0_8 = arith.constant 0 : index
    %c0_9 = arith.constant 0 : index
    %11 = vector.load %arg5[%c0_8, %c0_9] : memref<1x3xf32, #tpu.memory_space<vmem>>, vector<1x3xf32>
    %12 = vector.broadcast %11 : vector<1x3xf32> to vector<2x3xf32>
    %13 = arith.addf %10, %12 : vector<2x3xf32>
    %c0_10 = arith.constant 0 : index
    %c0_11 = arith.constant 0 : index
    %14 = vector.load %arg7[%c0_10, %c0_11] : memref<2x3xf32, #tpu.memory_space<vmem>>, vector<2x3xf32>
    tpu.vector_store %arg7[%c0_10, %c0_11], %13 {strides = array<i32>} : memref<2x3xf32, #tpu.memory_space<vmem>>, vector<2x3xf32>,
    %cst_12 = arith.constant dense<0xFF800000> : vector<2xf32>
    %15 = vector.multi_reduction <maximumf>, %13, %cst_12 [1] : vector<2x3xf32> to vector<2xf32>
    %16 = vector.shape_cast %15 : vector<2xf32> to vector<2x1xf32>
    %17 = vector.broadcast %16 : vector<2x1xf32> to vector<2x3xf32>
    %18 = arith.subf %13, %17 : vector<2x3xf32>
    %19 = math.exp %18 : vector<2x3xf32>
    %cst_13 = arith.constant dense<0.000000e+00> : vector<2xf32>
    %20 = vector.multi_reduction <add>, %19, %cst_13 [1] : vector<2x3xf32> to vector<2xf32>
    %21 = vector.shape_cast %20 : vector<2xf32> to vector<2x1xf32>
    %22 = math.log %21 : vector<2x1xf32>
    %23 = tpu.iota {dimensions = array<i32: 1>} : vector<2x3xi32>
    %c0_14 = arith.constant 0 : index
    %c0_15 = arith.constant 0 : index
    %24 = vector.load %arg6[%c0_14, %c0_15] : memref<2x1xi32, #tpu.memory_space<vmem>>, vector<2x1xi32>
    %25 = vector.broadcast %24 : vector<2x1xi32> to vector<2x3xi32>
    %26 = arith.cmpi eq, %23, %25 : vector<2x3xi32>
    %27 = arith.extui %26 : vector<2x3xi1> to vector<2x3xi32>
    %28 = arith.sitofp %27 : vector<2x3xi32> to vector<2x3xf32>
    %29 = vector.broadcast %22 : vector<2x1xf32> to vector<2x3xf32>
    %30 = arith.subf %18, %29 : vector<2x3xf32>
    %31 = arith.mulf %28, %30 : vector<2x3xf32>
    %cst_16 = arith.constant dense<0.000000e+00> : vector<2xf32>
    %32 = vector.multi_reduction <add>, %31, %cst_16 [1] : vector<2x3xf32> to vector<2xf32>
    %33 = vector.shape_cast %32 : vector<2xf32> to vector<2x1xf32>
    %cst_17 = arith.constant 0.000000e+00 : f32
    %34 = vector.broadcast %cst_17 : f32 to vector<2x1xf32>
    %35 = arith.subf %34, %33 : vector<2x1xf32>
    %c0_18 = arith.constant 0 : index
    %c0_19 = arith.constant 0 : index
    %36 = vector.load %arg8[%c0_18, %c0_19] : memref<2x1xf32, #tpu.memory_space<vmem>>, vector<2x1xf32>
    tpu.vector_store %arg8[%c0_18, %c0_19], %35 {strides = array<i32>} : memref<2x1xf32, #tpu.memory_space<vmem>>, vector<2x1xf32>,
    return
  }
  func.func @transform_0(%arg0: i32) -> (i32, i32) {
    %c0_i32 = arith.constant 0 : i32
    %c0_i32_0 = arith.constant 0 : i32
    %c0_i32_1 = arith.constant 0 : i32
    return %c0_i32, %c0_i32_0 : i32, i32
  }
  func.func @transform_1(%arg0: i32) -> (i32, i32) {
    %c0_i32 = arith.constant 0 : i32
    %c0_i32_0 = arith.constant 0 : i32
    %c0_i32_1 = arith.constant 0 : i32
    return %c0_i32, %c0_i32_0 : i32, i32
  }
  func.func @transform_2(%arg0: i32) -> (i32, i32) {
    %c0_i32 = arith.constant 0 : i32
    %c0_i32_0 = arith.constant 0 : i32
    %c0_i32_1 = arith.constant 0 : i32
    return %c0_i32, %c0_i32_0 : i32, i32
  }
  func.func @transform_3(%arg0: i32) -> (i32, i32) {
    %c0_i32 = arith.constant 0 : i32
    %c0_i32_0 = arith.constant 0 : i32
    %c0_i32_1 = arith.constant 0 : i32
    return %c0_i32, %c0_i32_0 : i32, i32
  }
  func.func @transform_4(%arg0: i32) -> (i32, i32) {
    %c0_i32 = arith.constant 0 : i32
    %c0_i32_0 = arith.constant 0 : i32
    %c0_i32_1 = arith.constant 0 : i32
    return %c0_i32, %c0_i32_0 : i32, i32
  }
  func.func @transform_5(%arg0: i32) -> (i32, i32) {
    %c0_i32 = arith.constant 0 : i32
    %c0_i32_0 = arith.constant 0 : i32
    %c0_i32_1 = arith.constant 0 : i32
    return %c0_i32, %c0_i32_0 : i32, i32
  }
  func.func @transform_6(%arg0: i32) -> (i32, i32) {
    %c0_i32 = arith.constant 0 : i32
    %c0_i32_0 = arith.constant 0 : i32
    %c0_i32_1 = arith.constant 0 : i32
    return %c0_i32, %c0_i32_0 : i32, i32
  }
  func.func @transform_7(%arg0: i32) -> (i32, i32) {
    %c0_i32 = arith.constant 0 : i32
    %c0_i32_0 = arith.constant 0 : i32
    %c0_i32_1 = arith.constant 0 : i32
    return %c0_i32, %c0_i32_0 : i32, i32
  }
}

module attributes {stable_mosaic.version = 11 : i64} {
  func.func @_bert_encoder_kernel(%arg0: i32, %arg1: memref<2x8xf32, #tpu.memory_space<vmem>>, %arg2: memref<16x32xf32, #tpu.memory_space<vmem>>, %arg3: memref<1x32xf32, #tpu.memory_space<vmem>>, %arg4: memref<1x32xf32, #tpu.memory_space<vmem>>, %arg5: memref<1x32x96xbf16, #tpu.memory_space<vmem>>, %arg6: memref<1x1x96xf32, #tpu.memory_space<vmem>>, %arg7: memref<1x32x32xbf16, #tpu.memory_space<vmem>>, %arg8: memref<1x1x32xf32, #tpu.memory_space<vmem>>, %arg9: memref<1x1x32xf32, #tpu.memory_space<vmem>>, %arg10: memref<1x1x32xf32, #tpu.memory_space<vmem>>, %arg11: memref<1x32x128xbf16, #tpu.memory_space<vmem>>, %arg12: memref<1x1x128xf32, #tpu.memory_space<vmem>>, %arg13: memref<1x128x32xbf16, #tpu.memory_space<vmem>>, %arg14: memref<1x1x32xf32, #tpu.memory_space<vmem>>, %arg15: memref<1x1x32xf32, #tpu.memory_space<vmem>>, %arg16: memref<1x1x32xf32, #tpu.memory_space<vmem>>, %arg17: memref<16x32xf32, #tpu.memory_space<vmem>>) attributes {dimension_semantics = [#tpu.dimension_semantics<arbitrary>], iteration_bounds = array<i64: 2>, scalar_prefetch = 0 : i64, scratch_operands = 0 : i64, tpu.core_type = #tpu.core_type<tc>, window_params = [{pipeline_mode = #tpu.pipeline_mode<synchronous>, transform_indices = @transform_0, window_bounds = array<i64: 2, 8>}, {pipeline_mode = #tpu.pipeline_mode<synchronous>, transform_indices = @transform_1, window_bounds = array<i64: 16, 32>}, {pipeline_mode = #tpu.pipeline_mode<synchronous>, transform_indices = @transform_2, window_bounds = array<i64: 1, 32>}, {pipeline_mode = #tpu.pipeline_mode<synchronous>, transform_indices = @transform_3, window_bounds = array<i64: 1, 32>}, {transform_indices = @transform_4, window_bounds = array<i64: 1, 32, 96>}, {transform_indices = @transform_5, window_bounds = array<i64: 1, 1, 96>}, {transform_indices = @transform_6, window_bounds = array<i64: 1, 32, 32>}, {transform_indices = @transform_7, window_bounds = array<i64: 1, 1, 32>}, {transform_indices = @transform_8, window_bounds = array<i64: 1, 1, 32>}, {transform_indices = @transform_9, window_bounds = array<i64: 1, 1, 32>}, {transform_indices = @transform_10, window_bounds = array<i64: 1, 32, 128>}, {transform_indices = @transform_11, window_bounds = array<i64: 1, 1, 128>}, {transform_indices = @transform_12, window_bounds = array<i64: 1, 128, 32>}, {transform_indices = @transform_13, window_bounds = array<i64: 1, 1, 32>}, {transform_indices = @transform_14, window_bounds = array<i64: 1, 1, 32>}, {transform_indices = @transform_15, window_bounds = array<i64: 1, 1, 32>}, {pipeline_mode = #tpu.pipeline_mode<synchronous>, transform_indices = @transform_16, window_bounds = array<i64: 16, 32>}]} {
    %c0_i32 = arith.constant 0 : i32
    %0 = arith.cmpi eq, %arg0, %c0_i32 : i32
    %1 = arith.extui %0 : i1 to i32
    %c0_i32_0 = arith.constant 0 : i32
    %2 = arith.cmpi ne, %1, %c0_i32_0 : i32
    scf.if %2 {
      %c0_81 = arith.constant 0 : index
      %c0_82 = arith.constant 0 : index
      %203 = vector.load %arg2[%c0_81, %c0_82] : memref<16x32xf32, #tpu.memory_space<vmem>>, vector<16x32xf32>
      %c0_83 = arith.constant 0 : index
      %c0_84 = arith.constant 0 : index
      %204 = vector.load %arg3[%c0_83, %c0_84] : memref<1x32xf32, #tpu.memory_space<vmem>>, vector<1x32xf32>
      %c0_85 = arith.constant 0 : index
      %c0_86 = arith.constant 0 : index
      %205 = vector.load %arg4[%c0_85, %c0_86] : memref<1x32xf32, #tpu.memory_space<vmem>>, vector<1x32xf32>
      %cst_87 = arith.constant dense<0.000000e+00> : vector<16xf32>
      %206 = vector.multi_reduction <add>, %203, %cst_87 [1] : vector<16x32xf32> to vector<16xf32>
      %207 = vector.shape_cast %206 : vector<16xf32> to vector<16x1xf32>
      %cst_88 = arith.constant 3.200000e+01 : f32
      %208 = vector.broadcast %cst_88 : f32 to vector<16x1xf32>
      %209 = arith.divf %207, %208 : vector<16x1xf32>
      %210 = vector.broadcast %209 : vector<16x1xf32> to vector<16x32xf32>
      %211 = arith.subf %203, %210 : vector<16x32xf32>
      %212 = arith.mulf %211, %211 : vector<16x32xf32>
      %cst_89 = arith.constant dense<0.000000e+00> : vector<16xf32>
      %213 = vector.multi_reduction <add>, %212, %cst_89 [1] : vector<16x32xf32> to vector<16xf32>
      %214 = vector.shape_cast %213 : vector<16xf32> to vector<16x1xf32>
      %cst_90 = arith.constant 3.200000e+01 : f32
      %215 = vector.broadcast %cst_90 : f32 to vector<16x1xf32>
      %216 = arith.divf %214, %215 : vector<16x1xf32>
      %217 = vector.broadcast %209 : vector<16x1xf32> to vector<16x32xf32>
      %218 = arith.subf %203, %217 : vector<16x32xf32>
      %cst_91 = arith.constant 9.99999996E-13 : f32
      %219 = vector.broadcast %cst_91 : f32 to vector<16x1xf32>
      %220 = arith.addf %216, %219 : vector<16x1xf32>
      %221 = math.rsqrt %220 : vector<16x1xf32>
      %222 = vector.broadcast %221 : vector<16x1xf32> to vector<16x32xf32>
      %223 = arith.mulf %218, %222 : vector<16x32xf32>
      %224 = vector.broadcast %204 : vector<1x32xf32> to vector<16x32xf32>
      %225 = arith.mulf %223, %224 : vector<16x32xf32>
      %226 = vector.broadcast %205 : vector<1x32xf32> to vector<16x32xf32>
      %227 = arith.addf %225, %226 : vector<16x32xf32>
      %c0_92 = arith.constant 0 : index
      %c0_93 = arith.constant 0 : index
      %228 = vector.load %arg17[%c0_92, %c0_93] : memref<16x32xf32, #tpu.memory_space<vmem>>, vector<16x32xf32>
      tpu.vector_store %arg17[%c0_92, %c0_93], %227 {strides = array<i32>} : memref<16x32xf32, #tpu.memory_space<vmem>>, vector<16x32xf32>,
    } else {
    }
    %c0 = arith.constant 0 : index
    %c0_1 = arith.constant 0 : index
    %3 = vector.load %arg17[%c0, %c0_1] : memref<16x32xf32, #tpu.memory_space<vmem>>, vector<16x32xf32>
    %4 = arith.truncf %3 : vector<16x32xf32> to vector<16x32xbf16>
    %c0_2 = arith.constant 0 : index
    %c0_3 = arith.constant 0 : index
    %c0_4 = arith.constant 0 : index
    %5 = vector.load %arg5[%c0_2, %c0_3, %c0_4] : memref<1x32x96xbf16, #tpu.memory_space<vmem>>, vector<1x32x96xbf16>
    %6 = vector.shape_cast %5 : vector<1x32x96xbf16> to vector<32x96xbf16>
    %cst = arith.constant dense<0.000000e+00> : vector<16x96xf32>
    %7 = tpu.matmul %4, %6, %cst {dimension_numbers = #tpu.dot_dimension_numbers<[1], [0], [0], [1], [0, 0, 1, 1], [], []>} : vector<16x32xbf16>, vector<32x96xbf16>, vector<16x96xf32> -> vector<16x96xf32>
    %c0_5 = arith.constant 0 : index
    %c0_6 = arith.constant 0 : index
    %c0_7 = arith.constant 0 : index
    %8 = vector.load %arg6[%c0_5, %c0_6, %c0_7] : memref<1x1x96xf32, #tpu.memory_space<vmem>>, vector<1x1x96xf32>
    %9 = vector.shape_cast %8 : vector<1x1x96xf32> to vector<1x96xf32>
    %10 = vector.broadcast %9 : vector<1x96xf32> to vector<16x96xf32>
    %11 = arith.addf %7, %10 : vector<16x96xf32>
    %c0_8 = arith.constant 0 : index
    %c0_9 = arith.constant 0 : index
    %12 = vector.load %arg1[%c0_8, %c0_9] : memref<2x8xf32, #tpu.memory_space<vmem>>, vector<2x8xf32>
    %cst_10 = arith.constant 1.000000e+00 : f32
    %13 = vector.broadcast %cst_10 : f32 to vector<2x8xf32>
    %14 = arith.subf %13, %12 : vector<2x8xf32>
    %cst_11 = arith.constant -1.000000e+04 : f32
    %15 = vector.broadcast %cst_11 : f32 to vector<2x8xf32>
    %16 = arith.mulf %14, %15 : vector<2x8xf32>
    %17 = vector.shape_cast %16 : vector<2x8xf32> to vector<2x1x8xf32>
    %18 = vector.extract_strided_slice %11 {offsets = [0, 0], sizes = [16, 8], strides = [1, 1]} : vector<16x96xf32> to vector<16x8xf32>
    %19 = vector.shape_cast %18 : vector<16x8xf32> to vector<2x8x8xf32>
    %20 = vector.extract_strided_slice %11 {offsets = [0, 32], sizes = [16, 8], strides = [1, 1]} : vector<16x96xf32> to vector<16x8xf32>
    %21 = vector.shape_cast %20 : vector<16x8xf32> to vector<2x8x8xf32>
    %22 = vector.extract_strided_slice %11 {offsets = [0, 64], sizes = [16, 8], strides = [1, 1]} : vector<16x96xf32> to vector<16x8xf32>
    %23 = vector.shape_cast %22 : vector<16x8xf32> to vector<2x8x8xf32>
    "tpu.trace_start"() <{level = 10 : i32, message = "bqd,bkd->bqk"}> : () -> ()
    %cst_12 = arith.constant dense<0.000000e+00> : vector<2x8x8xf32>
    %24 = tpu.matmul %19, %21, %cst_12 {dimension_numbers = #tpu.dot_dimension_numbers<[2], [2], [1], [1], [0, 0, 0, 1, 1, 1], [0], [0]>} : vector<2x8x8xf32>, vector<2x8x8xf32>, vector<2x8x8xf32> -> vector<2x8x8xf32>
    "tpu.trace_stop"() : () -> ()
    %cst_13 = arith.constant 0.353553385 : f32
    %25 = vector.broadcast %cst_13 : f32 to vector<2x8x8xf32>
    %26 = arith.mulf %24, %25 : vector<2x8x8xf32>
    %27 = vector.broadcast %17 : vector<2x1x8xf32> to vector<2x8x8xf32>
    %28 = arith.addf %26, %27 : vector<2x8x8xf32>
    %cst_14 = arith.constant dense<0xFF800000> : vector<2x8xf32>
    %29 = vector.multi_reduction <maximumf>, %28, %cst_14 [2] : vector<2x8x8xf32> to vector<2x8xf32>
    %30 = vector.shape_cast %29 : vector<2x8xf32> to vector<2x8x1xf32>
    %31 = vector.broadcast %30 : vector<2x8x1xf32> to vector<2x8x8xf32>
    %32 = arith.subf %28, %31 : vector<2x8x8xf32>
    %33 = math.exp %32 : vector<2x8x8xf32>
    %cst_15 = arith.constant dense<0.000000e+00> : vector<2x8xf32>
    %34 = vector.multi_reduction <add>, %33, %cst_15 [2] : vector<2x8x8xf32> to vector<2x8xf32>
    %35 = vector.shape_cast %34 : vector<2x8xf32> to vector<2x8x1xf32>
    %36 = tpu.reciprocal %35 {approx = true} : vector<2x8x1xf32> -> vector<2x8x1xf32>
    %37 = vector.broadcast %36 : vector<2x8x1xf32> to vector<2x8x8xf32>
    %38 = arith.mulf %33, %37 : vector<2x8x8xf32>
    "tpu.trace_start"() <{level = 10 : i32, message = "bqk,bkd->bqd"}> : () -> ()
    %cst_16 = arith.constant dense<0.000000e+00> : vector<2x8x8xf32>
    %39 = tpu.matmul %38, %23, %cst_16 {dimension_numbers = #tpu.dot_dimension_numbers<[2], [1], [1], [2], [0, 0, 0, 1, 1, 2], [0], [0]>} : vector<2x8x8xf32>, vector<2x8x8xf32>, vector<2x8x8xf32> -> vector<2x8x8xf32>
    "tpu.trace_stop"() : () -> ()
    %40 = vector.shape_cast %39 : vector<2x8x8xf32> to vector<16x8xf32>
    %41 = vector.extract_strided_slice %11 {offsets = [0, 8], sizes = [16, 8], strides = [1, 1]} : vector<16x96xf32> to vector<16x8xf32>
    %42 = vector.shape_cast %41 : vector<16x8xf32> to vector<2x8x8xf32>
    %43 = vector.extract_strided_slice %11 {offsets = [0, 40], sizes = [16, 8], strides = [1, 1]} : vector<16x96xf32> to vector<16x8xf32>
    %44 = vector.shape_cast %43 : vector<16x8xf32> to vector<2x8x8xf32>
    %45 = vector.extract_strided_slice %11 {offsets = [0, 72], sizes = [16, 8], strides = [1, 1]} : vector<16x96xf32> to vector<16x8xf32>
    %46 = vector.shape_cast %45 : vector<16x8xf32> to vector<2x8x8xf32>
    "tpu.trace_start"() <{level = 10 : i32, message = "bqd,bkd->bqk"}> : () -> ()
    %cst_17 = arith.constant dense<0.000000e+00> : vector<2x8x8xf32>
    %47 = tpu.matmul %42, %44, %cst_17 {dimension_numbers = #tpu.dot_dimension_numbers<[2], [2], [1], [1], [0, 0, 0, 1, 1, 1], [0], [0]>} : vector<2x8x8xf32>, vector<2x8x8xf32>, vector<2x8x8xf32> -> vector<2x8x8xf32>
    "tpu.trace_stop"() : () -> ()
    %cst_18 = arith.constant 0.353553385 : f32
    %48 = vector.broadcast %cst_18 : f32 to vector<2x8x8xf32>
    %49 = arith.mulf %47, %48 : vector<2x8x8xf32>
    %50 = vector.broadcast %17 : vector<2x1x8xf32> to vector<2x8x8xf32>
    %51 = arith.addf %49, %50 : vector<2x8x8xf32>
    %cst_19 = arith.constant dense<0xFF800000> : vector<2x8xf32>
    %52 = vector.multi_reduction <maximumf>, %51, %cst_19 [2] : vector<2x8x8xf32> to vector<2x8xf32>
    %53 = vector.shape_cast %52 : vector<2x8xf32> to vector<2x8x1xf32>
    %54 = vector.broadcast %53 : vector<2x8x1xf32> to vector<2x8x8xf32>
    %55 = arith.subf %51, %54 : vector<2x8x8xf32>
    %56 = math.exp %55 : vector<2x8x8xf32>
    %cst_20 = arith.constant dense<0.000000e+00> : vector<2x8xf32>
    %57 = vector.multi_reduction <add>, %56, %cst_20 [2] : vector<2x8x8xf32> to vector<2x8xf32>
    %58 = vector.shape_cast %57 : vector<2x8xf32> to vector<2x8x1xf32>
    %59 = tpu.reciprocal %58 {approx = true} : vector<2x8x1xf32> -> vector<2x8x1xf32>
    %60 = vector.broadcast %59 : vector<2x8x1xf32> to vector<2x8x8xf32>
    %61 = arith.mulf %56, %60 : vector<2x8x8xf32>
    "tpu.trace_start"() <{level = 10 : i32, message = "bqk,bkd->bqd"}> : () -> ()
    %cst_21 = arith.constant dense<0.000000e+00> : vector<2x8x8xf32>
    %62 = tpu.matmul %61, %46, %cst_21 {dimension_numbers = #tpu.dot_dimension_numbers<[2], [1], [1], [2], [0, 0, 0, 1, 1, 2], [0], [0]>} : vector<2x8x8xf32>, vector<2x8x8xf32>, vector<2x8x8xf32> -> vector<2x8x8xf32>
    "tpu.trace_stop"() : () -> ()
    %63 = vector.shape_cast %62 : vector<2x8x8xf32> to vector<16x8xf32>
    %64 = vector.extract_strided_slice %11 {offsets = [0, 16], sizes = [16, 8], strides = [1, 1]} : vector<16x96xf32> to vector<16x8xf32>
    %65 = vector.shape_cast %64 : vector<16x8xf32> to vector<2x8x8xf32>
    %66 = vector.extract_strided_slice %11 {offsets = [0, 48], sizes = [16, 8], strides = [1, 1]} : vector<16x96xf32> to vector<16x8xf32>
    %67 = vector.shape_cast %66 : vector<16x8xf32> to vector<2x8x8xf32>
    %68 = vector.extract_strided_slice %11 {offsets = [0, 80], sizes = [16, 8], strides = [1, 1]} : vector<16x96xf32> to vector<16x8xf32>
    %69 = vector.shape_cast %68 : vector<16x8xf32> to vector<2x8x8xf32>
    "tpu.trace_start"() <{level = 10 : i32, message = "bqd,bkd->bqk"}> : () -> ()
    %cst_22 = arith.constant dense<0.000000e+00> : vector<2x8x8xf32>
    %70 = tpu.matmul %65, %67, %cst_22 {dimension_numbers = #tpu.dot_dimension_numbers<[2], [2], [1], [1], [0, 0, 0, 1, 1, 1], [0], [0]>} : vector<2x8x8xf32>, vector<2x8x8xf32>, vector<2x8x8xf32> -> vector<2x8x8xf32>
    "tpu.trace_stop"() : () -> ()
    %cst_23 = arith.constant 0.353553385 : f32
    %71 = vector.broadcast %cst_23 : f32 to vector<2x8x8xf32>
    %72 = arith.mulf %70, %71 : vector<2x8x8xf32>
    %73 = vector.broadcast %17 : vector<2x1x8xf32> to vector<2x8x8xf32>
    %74 = arith.addf %72, %73 : vector<2x8x8xf32>
    %cst_24 = arith.constant dense<0xFF800000> : vector<2x8xf32>
    %75 = vector.multi_reduction <maximumf>, %74, %cst_24 [2] : vector<2x8x8xf32> to vector<2x8xf32>
    %76 = vector.shape_cast %75 : vector<2x8xf32> to vector<2x8x1xf32>
    %77 = vector.broadcast %76 : vector<2x8x1xf32> to vector<2x8x8xf32>
    %78 = arith.subf %74, %77 : vector<2x8x8xf32>
    %79 = math.exp %78 : vector<2x8x8xf32>
    %cst_25 = arith.constant dense<0.000000e+00> : vector<2x8xf32>
    %80 = vector.multi_reduction <add>, %79, %cst_25 [2] : vector<2x8x8xf32> to vector<2x8xf32>
    %81 = vector.shape_cast %80 : vector<2x8xf32> to vector<2x8x1xf32>
    %82 = tpu.reciprocal %81 {approx = true} : vector<2x8x1xf32> -> vector<2x8x1xf32>
    %83 = vector.broadcast %82 : vector<2x8x1xf32> to vector<2x8x8xf32>
    %84 = arith.mulf %79, %83 : vector<2x8x8xf32>
    "tpu.trace_start"() <{level = 10 : i32, message = "bqk,bkd->bqd"}> : () -> ()
    %cst_26 = arith.constant dense<0.000000e+00> : vector<2x8x8xf32>
    %85 = tpu.matmul %84, %69, %cst_26 {dimension_numbers = #tpu.dot_dimension_numbers<[2], [1], [1], [2], [0, 0, 0, 1, 1, 2], [0], [0]>} : vector<2x8x8xf32>, vector<2x8x8xf32>, vector<2x8x8xf32> -> vector<2x8x8xf32>
    "tpu.trace_stop"() : () -> ()
    %86 = vector.shape_cast %85 : vector<2x8x8xf32> to vector<16x8xf32>
    %87 = vector.extract_strided_slice %11 {offsets = [0, 24], sizes = [16, 8], strides = [1, 1]} : vector<16x96xf32> to vector<16x8xf32>
    %88 = vector.shape_cast %87 : vector<16x8xf32> to vector<2x8x8xf32>
    %89 = vector.extract_strided_slice %11 {offsets = [0, 56], sizes = [16, 8], strides = [1, 1]} : vector<16x96xf32> to vector<16x8xf32>
    %90 = vector.shape_cast %89 : vector<16x8xf32> to vector<2x8x8xf32>
    %91 = vector.extract_strided_slice %11 {offsets = [0, 88], sizes = [16, 8], strides = [1, 1]} : vector<16x96xf32> to vector<16x8xf32>
    %92 = vector.shape_cast %91 : vector<16x8xf32> to vector<2x8x8xf32>
    "tpu.trace_start"() <{level = 10 : i32, message = "bqd,bkd->bqk"}> : () -> ()
    %cst_27 = arith.constant dense<0.000000e+00> : vector<2x8x8xf32>
    %93 = tpu.matmul %88, %90, %cst_27 {dimension_numbers = #tpu.dot_dimension_numbers<[2], [2], [1], [1], [0, 0, 0, 1, 1, 1], [0], [0]>} : vector<2x8x8xf32>, vector<2x8x8xf32>, vector<2x8x8xf32> -> vector<2x8x8xf32>
    "tpu.trace_stop"() : () -> ()
    %cst_28 = arith.constant 0.353553385 : f32
    %94 = vector.broadcast %cst_28 : f32 to vector<2x8x8xf32>
    %95 = arith.mulf %93, %94 : vector<2x8x8xf32>
    %96 = vector.broadcast %17 : vector<2x1x8xf32> to vector<2x8x8xf32>
    %97 = arith.addf %95, %96 : vector<2x8x8xf32>
    %cst_29 = arith.constant dense<0xFF800000> : vector<2x8xf32>
    %98 = vector.multi_reduction <maximumf>, %97, %cst_29 [2] : vector<2x8x8xf32> to vector<2x8xf32>
    %99 = vector.shape_cast %98 : vector<2x8xf32> to vector<2x8x1xf32>
    %100 = vector.broadcast %99 : vector<2x8x1xf32> to vector<2x8x8xf32>
    %101 = arith.subf %97, %100 : vector<2x8x8xf32>
    %102 = math.exp %101 : vector<2x8x8xf32>
    %cst_30 = arith.constant dense<0.000000e+00> : vector<2x8xf32>
    %103 = vector.multi_reduction <add>, %102, %cst_30 [2] : vector<2x8x8xf32> to vector<2x8xf32>
    %104 = vector.shape_cast %103 : vector<2x8xf32> to vector<2x8x1xf32>
    %105 = tpu.reciprocal %104 {approx = true} : vector<2x8x1xf32> -> vector<2x8x1xf32>
    %106 = vector.broadcast %105 : vector<2x8x1xf32> to vector<2x8x8xf32>
    %107 = arith.mulf %102, %106 : vector<2x8x8xf32>
    "tpu.trace_start"() <{level = 10 : i32, message = "bqk,bkd->bqd"}> : () -> ()
    %cst_31 = arith.constant dense<0.000000e+00> : vector<2x8x8xf32>
    %108 = tpu.matmul %107, %92, %cst_31 {dimension_numbers = #tpu.dot_dimension_numbers<[2], [1], [1], [2], [0, 0, 0, 1, 1, 2], [0], [0]>} : vector<2x8x8xf32>, vector<2x8x8xf32>, vector<2x8x8xf32> -> vector<2x8x8xf32>
    "tpu.trace_stop"() : () -> ()
    %109 = vector.shape_cast %108 : vector<2x8x8xf32> to vector<16x8xf32>
    %110 = tpu.concatenate %40, %63, %86, %109 in 1 : vector<16x8xf32>, vector<16x8xf32>, vector<16x8xf32>, vector<16x8xf32> -> vector<16x32xf32>
    %111 = arith.truncf %110 : vector<16x32xf32> to vector<16x32xbf16>
    %c0_32 = arith.constant 0 : index
    %c0_33 = arith.constant 0 : index
    %c0_34 = arith.constant 0 : index
    %112 = vector.load %arg7[%c0_32, %c0_33, %c0_34] : memref<1x32x32xbf16, #tpu.memory_space<vmem>>, vector<1x32x32xbf16>
    %113 = vector.shape_cast %112 : vector<1x32x32xbf16> to vector<32x32xbf16>
    %cst_35 = arith.constant dense<0.000000e+00> : vector<16x32xf32>
    %114 = tpu.matmul %111, %113, %cst_35 {dimension_numbers = #tpu.dot_dimension_numbers<[1], [0], [0], [1], [0, 0, 1, 1], [], []>} : vector<16x32xbf16>, vector<32x32xbf16>, vector<16x32xf32> -> vector<16x32xf32>
    %c0_36 = arith.constant 0 : index
    %c0_37 = arith.constant 0 : index
    %c0_38 = arith.constant 0 : index
    %115 = vector.load %arg8[%c0_36, %c0_37, %c0_38] : memref<1x1x32xf32, #tpu.memory_space<vmem>>, vector<1x1x32xf32>
    %116 = vector.shape_cast %115 : vector<1x1x32xf32> to vector<1x32xf32>
    %117 = vector.broadcast %116 : vector<1x32xf32> to vector<16x32xf32>
    %118 = arith.addf %114, %117 : vector<16x32xf32>
    %119 = arith.addf %118, %3 : vector<16x32xf32>
    %c0_39 = arith.constant 0 : index
    %c0_40 = arith.constant 0 : index
    %c0_41 = arith.constant 0 : index
    %120 = vector.load %arg9[%c0_39, %c0_40, %c0_41] : memref<1x1x32xf32, #tpu.memory_space<vmem>>, vector<1x1x32xf32>
    %121 = vector.shape_cast %120 : vector<1x1x32xf32> to vector<1x32xf32>
    %c0_42 = arith.constant 0 : index
    %c0_43 = arith.constant 0 : index
    %c0_44 = arith.constant 0 : index
    %122 = vector.load %arg10[%c0_42, %c0_43, %c0_44] : memref<1x1x32xf32, #tpu.memory_space<vmem>>, vector<1x1x32xf32>
    %123 = vector.shape_cast %122 : vector<1x1x32xf32> to vector<1x32xf32>
    %cst_45 = arith.constant dense<0.000000e+00> : vector<16xf32>
    %124 = vector.multi_reduction <add>, %119, %cst_45 [1] : vector<16x32xf32> to vector<16xf32>
    %125 = vector.shape_cast %124 : vector<16xf32> to vector<16x1xf32>
    %cst_46 = arith.constant 3.200000e+01 : f32
    %126 = vector.broadcast %cst_46 : f32 to vector<16x1xf32>
    %127 = arith.divf %125, %126 : vector<16x1xf32>
    %128 = vector.broadcast %127 : vector<16x1xf32> to vector<16x32xf32>
    %129 = arith.subf %119, %128 : vector<16x32xf32>
    %130 = arith.mulf %129, %129 : vector<16x32xf32>
    %cst_47 = arith.constant dense<0.000000e+00> : vector<16xf32>
    %131 = vector.multi_reduction <add>, %130, %cst_47 [1] : vector<16x32xf32> to vector<16xf32>
    %132 = vector.shape_cast %131 : vector<16xf32> to vector<16x1xf32>
    %cst_48 = arith.constant 3.200000e+01 : f32
    %133 = vector.broadcast %cst_48 : f32 to vector<16x1xf32>
    %134 = arith.divf %132, %133 : vector<16x1xf32>
    %135 = vector.broadcast %127 : vector<16x1xf32> to vector<16x32xf32>
    %136 = arith.subf %119, %135 : vector<16x32xf32>
    %cst_49 = arith.constant 9.99999996E-13 : f32
    %137 = vector.broadcast %cst_49 : f32 to vector<16x1xf32>
    %138 = arith.addf %134, %137 : vector<16x1xf32>
    %139 = math.rsqrt %138 : vector<16x1xf32>
    %140 = vector.broadcast %139 : vector<16x1xf32> to vector<16x32xf32>
    %141 = arith.mulf %136, %140 : vector<16x32xf32>
    %142 = vector.broadcast %121 : vector<1x32xf32> to vector<16x32xf32>
    %143 = arith.mulf %141, %142 : vector<16x32xf32>
    %144 = vector.broadcast %123 : vector<1x32xf32> to vector<16x32xf32>
    %145 = arith.addf %143, %144 : vector<16x32xf32>
    %146 = arith.truncf %145 : vector<16x32xf32> to vector<16x32xbf16>
    %c0_50 = arith.constant 0 : index
    %c0_51 = arith.constant 0 : index
    %c0_52 = arith.constant 0 : index
    %147 = vector.load %arg11[%c0_50, %c0_51, %c0_52] : memref<1x32x128xbf16, #tpu.memory_space<vmem>>, vector<1x32x128xbf16>
    %148 = vector.shape_cast %147 : vector<1x32x128xbf16> to vector<32x128xbf16>
    %cst_53 = arith.constant dense<0.000000e+00> : vector<16x128xf32>
    %149 = tpu.matmul %146, %148, %cst_53 {dimension_numbers = #tpu.dot_dimension_numbers<[1], [0], [0], [1], [0, 0, 1, 1], [], []>} : vector<16x32xbf16>, vector<32x128xbf16>, vector<16x128xf32> -> vector<16x128xf32>
    %c0_54 = arith.constant 0 : index
    %c0_55 = arith.constant 0 : index
    %c0_56 = arith.constant 0 : index
    %150 = vector.load %arg12[%c0_54, %c0_55, %c0_56] : memref<1x1x128xf32, #tpu.memory_space<vmem>>, vector<1x1x128xf32>
    %151 = vector.shape_cast %150 : vector<1x1x128xf32> to vector<1x128xf32>
    %152 = vector.broadcast %151 : vector<1x128xf32> to vector<16x128xf32>
    %153 = arith.addf %149, %152 : vector<16x128xf32>
    %cst_57 = arith.constant 5.000000e-01 : f32
    %154 = vector.broadcast %cst_57 : f32 to vector<16x128xf32>
    %155 = arith.mulf %154, %153 : vector<16x128xf32>
    %cst_58 = arith.constant 4.471500e-02 : f32
    %156 = vector.broadcast %cst_58 : f32 to vector<16x128xf32>
    %157 = arith.mulf %156, %153 : vector<16x128xf32>
    %158 = arith.mulf %157, %153 : vector<16x128xf32>
    %159 = arith.mulf %158, %153 : vector<16x128xf32>
    %160 = arith.addf %153, %159 : vector<16x128xf32>
    %cst_59 = arith.constant 0.797884583 : f32
    %161 = vector.broadcast %cst_59 : f32 to vector<16x128xf32>
    %162 = arith.mulf %161, %160 : vector<16x128xf32>
    %163 = math.tanh %162 : vector<16x128xf32>
    %cst_60 = arith.constant 1.000000e+00 : f32
    %164 = vector.broadcast %cst_60 : f32 to vector<16x128xf32>
    %165 = arith.addf %164, %163 : vector<16x128xf32>
    %166 = arith.mulf %155, %165 : vector<16x128xf32>
    %167 = arith.truncf %166 : vector<16x128xf32> to vector<16x128xbf16>
    %c0_61 = arith.constant 0 : index
    %c0_62 = arith.constant 0 : index
    %c0_63 = arith.constant 0 : index
    %168 = vector.load %arg13[%c0_61, %c0_62, %c0_63] : memref<1x128x32xbf16, #tpu.memory_space<vmem>>, vector<1x128x32xbf16>
    %169 = vector.shape_cast %168 : vector<1x128x32xbf16> to vector<128x32xbf16>
    %cst_64 = arith.constant dense<0.000000e+00> : vector<16x32xf32>
    %170 = tpu.matmul %167, %169, %cst_64 {dimension_numbers = #tpu.dot_dimension_numbers<[1], [0], [0], [1], [0, 0, 1, 1], [], []>} : vector<16x128xbf16>, vector<128x32xbf16>, vector<16x32xf32> -> vector<16x32xf32>
    %c0_65 = arith.constant 0 : index
    %c0_66 = arith.constant 0 : index
    %c0_67 = arith.constant 0 : index
    %171 = vector.load %arg14[%c0_65, %c0_66, %c0_67] : memref<1x1x32xf32, #tpu.memory_space<vmem>>, vector<1x1x32xf32>
    %172 = vector.shape_cast %171 : vector<1x1x32xf32> to vector<1x32xf32>
    %173 = vector.broadcast %172 : vector<1x32xf32> to vector<16x32xf32>
    %174 = arith.addf %170, %173 : vector<16x32xf32>
    %175 = arith.addf %174, %145 : vector<16x32xf32>
    %c0_68 = arith.constant 0 : index
    %c0_69 = arith.constant 0 : index
    %c0_70 = arith.constant 0 : index
    %176 = vector.load %arg15[%c0_68, %c0_69, %c0_70] : memref<1x1x32xf32, #tpu.memory_space<vmem>>, vector<1x1x32xf32>
    %177 = vector.shape_cast %176 : vector<1x1x32xf32> to vector<1x32xf32>
    %c0_71 = arith.constant 0 : index
    %c0_72 = arith.constant 0 : index
    %c0_73 = arith.constant 0 : index
    %178 = vector.load %arg16[%c0_71, %c0_72, %c0_73] : memref<1x1x32xf32, #tpu.memory_space<vmem>>, vector<1x1x32xf32>
    %179 = vector.shape_cast %178 : vector<1x1x32xf32> to vector<1x32xf32>
    %cst_74 = arith.constant dense<0.000000e+00> : vector<16xf32>
    %180 = vector.multi_reduction <add>, %175, %cst_74 [1] : vector<16x32xf32> to vector<16xf32>
    %181 = vector.shape_cast %180 : vector<16xf32> to vector<16x1xf32>
    %cst_75 = arith.constant 3.200000e+01 : f32
    %182 = vector.broadcast %cst_75 : f32 to vector<16x1xf32>
    %183 = arith.divf %181, %182 : vector<16x1xf32>
    %184 = vector.broadcast %183 : vector<16x1xf32> to vector<16x32xf32>
    %185 = arith.subf %175, %184 : vector<16x32xf32>
    %186 = arith.mulf %185, %185 : vector<16x32xf32>
    %cst_76 = arith.constant dense<0.000000e+00> : vector<16xf32>
    %187 = vector.multi_reduction <add>, %186, %cst_76 [1] : vector<16x32xf32> to vector<16xf32>
    %188 = vector.shape_cast %187 : vector<16xf32> to vector<16x1xf32>
    %cst_77 = arith.constant 3.200000e+01 : f32
    %189 = vector.broadcast %cst_77 : f32 to vector<16x1xf32>
    %190 = arith.divf %188, %189 : vector<16x1xf32>
    %191 = vector.broadcast %183 : vector<16x1xf32> to vector<16x32xf32>
    %192 = arith.subf %175, %191 : vector<16x32xf32>
    %cst_78 = arith.constant 9.99999996E-13 : f32
    %193 = vector.broadcast %cst_78 : f32 to vector<16x1xf32>
    %194 = arith.addf %190, %193 : vector<16x1xf32>
    %195 = math.rsqrt %194 : vector<16x1xf32>
    %196 = vector.broadcast %195 : vector<16x1xf32> to vector<16x32xf32>
    %197 = arith.mulf %192, %196 : vector<16x32xf32>
    %198 = vector.broadcast %177 : vector<1x32xf32> to vector<16x32xf32>
    %199 = arith.mulf %197, %198 : vector<16x32xf32>
    %200 = vector.broadcast %179 : vector<1x32xf32> to vector<16x32xf32>
    %201 = arith.addf %199, %200 : vector<16x32xf32>
    %c0_79 = arith.constant 0 : index
    %c0_80 = arith.constant 0 : index
    %202 = vector.load %arg17[%c0_79, %c0_80] : memref<16x32xf32, #tpu.memory_space<vmem>>, vector<16x32xf32>
    tpu.vector_store %arg17[%c0_79, %c0_80], %201 {strides = array<i32>} : memref<16x32xf32, #tpu.memory_space<vmem>>, vector<16x32xf32>,
    return
  }
  func.func @transform_0(%arg0: i32) -> (i32, i32) {
    %c0_i32 = arith.constant 0 : i32
    %c0_i32_0 = arith.constant 0 : i32
    %c0_i32_1 = arith.constant 0 : i32
    return %c0_i32, %c0_i32_0 : i32, i32
  }
  func.func @transform_1(%arg0: i32) -> (i32, i32) {
    %c0_i32 = arith.constant 0 : i32
    %c0_i32_0 = arith.constant 0 : i32
    %c0_i32_1 = arith.constant 0 : i32
    return %c0_i32, %c0_i32_0 : i32, i32
  }
  func.func @transform_2(%arg0: i32) -> (i32, i32) {
    %c0_i32 = arith.constant 0 : i32
    %c0_i32_0 = arith.constant 0 : i32
    %c0_i32_1 = arith.constant 0 : i32
    return %c0_i32, %c0_i32_0 : i32, i32
  }
  func.func @transform_3(%arg0: i32) -> (i32, i32) {
    %c0_i32 = arith.constant 0 : i32
    %c0_i32_0 = arith.constant 0 : i32
    %c0_i32_1 = arith.constant 0 : i32
    return %c0_i32, %c0_i32_0 : i32, i32
  }
  func.func @transform_4(%arg0: i32) -> (i32, i32, i32) {
    %c0_i32 = arith.constant 0 : i32
    %c0_i32_0 = arith.constant 0 : i32
    %c0_i32_1 = arith.constant 0 : i32
    return %arg0, %c0_i32, %c0_i32_0 : i32, i32, i32
  }
  func.func @transform_5(%arg0: i32) -> (i32, i32, i32) {
    %c0_i32 = arith.constant 0 : i32
    %c0_i32_0 = arith.constant 0 : i32
    %c0_i32_1 = arith.constant 0 : i32
    return %arg0, %c0_i32, %c0_i32_0 : i32, i32, i32
  }
  func.func @transform_6(%arg0: i32) -> (i32, i32, i32) {
    %c0_i32 = arith.constant 0 : i32
    %c0_i32_0 = arith.constant 0 : i32
    %c0_i32_1 = arith.constant 0 : i32
    return %arg0, %c0_i32, %c0_i32_0 : i32, i32, i32
  }
  func.func @transform_7(%arg0: i32) -> (i32, i32, i32) {
    %c0_i32 = arith.constant 0 : i32
    %c0_i32_0 = arith.constant 0 : i32
    %c0_i32_1 = arith.constant 0 : i32
    return %arg0, %c0_i32, %c0_i32_0 : i32, i32, i32
  }
  func.func @transform_8(%arg0: i32) -> (i32, i32, i32) {
    %c0_i32 = arith.constant 0 : i32
    %c0_i32_0 = arith.constant 0 : i32
    %c0_i32_1 = arith.constant 0 : i32
    return %arg0, %c0_i32, %c0_i32_0 : i32, i32, i32
  }
  func.func @transform_9(%arg0: i32) -> (i32, i32, i32) {
    %c0_i32 = arith.constant 0 : i32
    %c0_i32_0 = arith.constant 0 : i32
    %c0_i32_1 = arith.constant 0 : i32
    return %arg0, %c0_i32, %c0_i32_0 : i32, i32, i32
  }
  func.func @transform_10(%arg0: i32) -> (i32, i32, i32) {
    %c0_i32 = arith.constant 0 : i32
    %c0_i32_0 = arith.constant 0 : i32
    %c0_i32_1 = arith.constant 0 : i32
    return %arg0, %c0_i32, %c0_i32_0 : i32, i32, i32
  }
  func.func @transform_11(%arg0: i32) -> (i32, i32, i32) {
    %c0_i32 = arith.constant 0 : i32
    %c0_i32_0 = arith.constant 0 : i32
    %c0_i32_1 = arith.constant 0 : i32
    return %arg0, %c0_i32, %c0_i32_0 : i32, i32, i32
  }
  func.func @transform_12(%arg0: i32) -> (i32, i32, i32) {
    %c0_i32 = arith.constant 0 : i32
    %c0_i32_0 = arith.constant 0 : i32
    %c0_i32_1 = arith.constant 0 : i32
    return %arg0, %c0_i32, %c0_i32_0 : i32, i32, i32
  }
  func.func @transform_13(%arg0: i32) -> (i32, i32, i32) {
    %c0_i32 = arith.constant 0 : i32
    %c0_i32_0 = arith.constant 0 : i32
    %c0_i32_1 = arith.constant 0 : i32
    return %arg0, %c0_i32, %c0_i32_0 : i32, i32, i32
  }
  func.func @transform_14(%arg0: i32) -> (i32, i32, i32) {
    %c0_i32 = arith.constant 0 : i32
    %c0_i32_0 = arith.constant 0 : i32
    %c0_i32_1 = arith.constant 0 : i32
    return %arg0, %c0_i32, %c0_i32_0 : i32, i32, i32
  }
  func.func @transform_15(%arg0: i32) -> (i32, i32, i32) {
    %c0_i32 = arith.constant 0 : i32
    %c0_i32_0 = arith.constant 0 : i32
    %c0_i32_1 = arith.constant 0 : i32
    return %arg0, %c0_i32, %c0_i32_0 : i32, i32, i32
  }
  func.func @transform_16(%arg0: i32) -> (i32, i32) {
    %c0_i32 = arith.constant 0 : i32
    %c0_i32_0 = arith.constant 0 : i32
    %c0_i32_1 = arith.constant 0 : i32
    return %c0_i32, %c0_i32_0 : i32, i32
  }
}

</mosaic_0001>

<llo_original>
// kernel: custom_bert_forward.3
$region0: #{custom_bert_forward.3}
  #allocation0 [shape = 'u32[]', space=smem, size = 0x4, offset = 0x4, fixed_abs, tag = 'smem constant byte address 0x4 - core index']
  #allocation1 [shape = 'u32[72,128]{1,0:T(1,128)}', space=vmem, size = 0x9000, scoped, tag = 'internal scratch']
  %s0 = inlined_call_operand.vmem [shape: f32[2,32], index: 0, kind: input, shape index: {}]
  %s1 = inlined_call_operand.vmem [shape: bf16[32,32], index: 1, kind: input, shape index: {}]
  %s2 = inlined_call_operand.vmem [shape: f32[1,32], index: 2, kind: input, shape index: {}]
  %s3 = inlined_call_operand.vmem [shape: bf16[32,3], index: 3, kind: input, shape index: {}]
  %s4 = inlined_call_operand.vmem [shape: f32[1,3], index: 4, kind: input, shape index: {}]
  %s5 = inlined_call_operand.vmem [shape: s32[2,1], index: 5, kind: input, shape index: {}]
  %s6 = inlined_call_operand.hbm [shape: f32[2,3], index: 6, kind: output, shape index: {0}]
  %s7 = inlined_call_operand.vmem [shape: f32[2,1], index: 7, kind: output, shape index: {1}]
  %8 = xla_tuple %s6, %s7
  %s9 = sld [smem:[#allocation0]]
  $region42: #{custom_bert_forward.3} parent=0
    _
  %s11 = ssub.s32 1, %s9
  %s12 = scalar_select 0, %s11, %s9
  $region1: #{custom_bert_forward.3} parent=0
    #allocation2 [shape = 'u8[1024]{0}', space=vmem, size = 0x400, scoped, tag = 'output window, operand 0, single buffered']
    #allocation3 [shape = 's32[1]{0}', space=sflag, size = 0x4, scoped, tag = 'scoped memory for custom_bert_forward.3']
    %13 = vsyncpa [#allocation3], 0
    // Predicated region
    $region2: #{custom_bert_forward.3} parent=1 // pred_check
      _
    $region3: #{custom_bert_forward.3} parent=1 // pred_check_branch
      %15 = sbr.rel (0) target = $region5
    $region4: #{custom_bert_forward.3} parent=1 // pred_region
      _
    $region5: #{custom_bert_forward.3} parent=1 // pred_fallthru
      _
    // Predicated region
    $region6: #{custom_bert_forward.3} parent=1 // pred_check
      _
    $region7: #{custom_bert_forward.3} parent=1 // pred_check_branch
      %17 = sbr.rel (0) target = $region9
    $region8: #{custom_bert_forward.3} parent=1 // pred_region
      _
    $region9: #{custom_bert_forward.3} parent=1 // pred_fallthru
      _
    // Predicated region
    $region10: #{custom_bert_forward.3} parent=1 // pred_check
      _
    $region11: #{custom_bert_forward.3} parent=1 // pred_check_branch
      %19 = sbr.rel (0) target = $region13
    $region12: #{custom_bert_forward.3} parent=1 // pred_region
      _
    $region13: #{custom_bert_forward.3} parent=1 // pred_fallthru
      _
    // Predicated region
    $region14: #{custom_bert_forward.3} parent=1 // pred_check
      _
    $region15: #{custom_bert_forward.3} parent=1 // pred_check_branch
      %21 = sbr.rel (0) target = $region17
    $region16: #{custom_bert_forward.3} parent=1 // pred_region
      _
    $region17: #{custom_bert_forward.3} parent=1 // pred_fallthru
      _
    // Predicated region
    $region18: #{custom_bert_forward.3} parent=1 // pred_check
      _
    $region19: #{custom_bert_forward.3} parent=1 // pred_check_branch
      %23 = sbr.rel (0) target = $region21
    $region20: #{custom_bert_forward.3} parent=1 // pred_region
      _
    $region21: #{custom_bert_forward.3} parent=1 // pred_fallthru
      _
    // Predicated region
    $region22: #{custom_bert_forward.3} parent=1 // pred_check
      _
    $region23: #{custom_bert_forward.3} parent=1 // pred_check_branch
      %25 = sbr.rel (0) target = $region25
    $region24: #{custom_bert_forward.3} parent=1 // pred_region
      _
    $region25: #{custom_bert_forward.3} parent=1 // pred_fallthru
      _
    %v27 = vld [vmem:[%s0] sm:$0x3]
    %v28 = vpack.c.bf16 %v27, %v27
    %v29 = vld [vmem:[%s1] sm:$0xf]
    %v30 = vld [vmem:[%s1 + $0x4] sm:$0xf]
    %v31 = vld [vmem:[%s1 + $0x8] sm:$0xf]
    %v32 = vld [vmem:[%s1 + $0xc] sm:$0xf]
    %v33 = vld [vmem:[%s2] sm:$0x1]
    %v35 = vperm.slane %v33, 0
    %v41 = vunpack.c.l.b16 %v29
    %v42 = vunpack.c.l.b16 %v30
    %v43 = vunpack.c.l.b16 %v31
    %v44 = vunpack.c.l.b16 %v32
    %v45 = vpack.c.b16 %v42, %v41
    %v46 = vpack.c.b16 %v44, %v43
    %vm49 = vcmask 261120
    %v51 = vsel %vm49, %v28, 0
    %53 = vmatpush.bf16.msra.mxu0 0
    %54 = vmatpush.bf16.msra.mxu0 0
    %55 = vmatpush.bf16.msra.mxu0 0
    %56 = vmatpush.bf16.msra.mxu0 0
    %57 = vmatpush.bf16.msra.mxu0 0
    %58 = vmatpush.bf16.msra.mxu0 0
    %59 = vmatpush.bf16.msra.mxu0 %v46
    %60 = vmatpush.bf16.msra.mxu0 %v45
    %61 = vmatmul.bf16.gmra.mxu0 %v51
    %v62 = vpop.f32.mrf.mxu0
    %v63 = vadd.f32 %v35, %v62
    %v64 = vpop.f32.mrf.mxu0
    %65 = vdwg.mxu0
    %v66 = vtanh.pop %v63
    %v67 = vpack.c.bf16 %v66, %v66
    %v68 = vld [vmem:[%s3] sm:$0xf]
    %v69 = vld [vmem:[%s3 + $0x4] sm:$0xf]
    %v70 = vld [vmem:[%s3 + $0x8] sm:$0xf]
    %v71 = vld [vmem:[%s3 + $0xc] sm:$0xf]
    %v72 = vld [vmem:[%s4] sm:$0x1]
    %v74 = vperm.slane %v72, 0
    %v80 = vunpack.c.l.b16 %v68
    %v81 = vunpack.c.l.b16 %v69
    %v82 = vunpack.c.l.b16 %v70
    %v83 = vunpack.c.l.b16 %v71
    %v84 = vpack.c.b16 %v81, %v80
    %v85 = vpack.c.b16 %v83, %v82
    %v89 = vsel %vm49, %v67, 0
    %91 = vmatpush.bf16.msra.mxu0 0
    %92 = vmatpush.bf16.msra.mxu0 0
    %93 = vmatpush.bf16.msra.mxu0 0
    %94 = vmatpush.bf16.msra.mxu0 0
    %95 = vmatpush.bf16.msra.mxu0 0
    %96 = vmatpush.bf16.msra.mxu0 0
    %97 = vmatpush.bf16.msra.mxu0 %v85
    %98 = vmatpush.bf16.msra.mxu0 %v84
    %99 = vmatmul.bf16.gmra.mxu0 %v89
    %v100 = vpop.f32.mrf.mxu0
    %v101 = vadd.f32 %v74, %v100
    %v102 = vpop.f32.mrf.mxu0
    %103 = vdwg.mxu0
    %vm104 = vcmask 17408
    %105 = vst.msk [vmem:[#allocation2] sm:$0x3] %vm104, %v101
    %v106 = vsel %vm104, %v101, -inf
    %107 = vmax.xlane.f32.xlu0 %v106
    %v108 = vpop.xlane.xlu0 %107
    %v109 = vsub.f32 %v101, %v108
    %v110 = vmul.f32 %v109, 1.442695
    %v111 = vpow.pop %v110
    %v112 = vsel %vm104, %v111, 0.0
    %113 = vadd.xlane.f32.xlu0 %v112
    %v114 = vpop.xlane.xlu0 %113
    %v115 = vlog2.pop %v114
    %v116 = vmul.f32 %v115, 0.6931472
    %v117 = vlaneseq
    %v118 = vand.u32 %v117, 127
    %v119 = vld [vmem:[%s5] sm:$0x3]
    %120 = vset.pattern.permute.xlu0 0
    %121 = vperm.xlu0 %120, %v119
    %v122 = vpop.permute.xlu0 %121
    %vm123 = vcmp.eq.s32.totalorder %v118, %v122
    %v124 = vsel %vm123, 1, 0
    %v125 = vcvt.s32.f32 %v124
    %v126 = vsub.f32 %v109, %v116
    %v127 = vmul.f32 %v125, %v126
    %v128 = vsel %vm104, %v127, 0.0
    %129 = vadd.xlane.f32.xlu0 %v128
    %v130 = vpop.xlane.xlu0 %129
    %v131 = vsub.f32 0.0, %v130
    %vm132 = vcmask 1024
    %133 = vst.msk [vmem:[%s7] sm:$0x3] %vm132, %v131
    // Predicated region
    $region26: #{custom_bert_forward.3} parent=1 // pred_check
      _
    $region27: #{custom_bert_forward.3} parent=1 // pred_check_branch
      %135 = sbr.rel (0) target = $region29
    $region28: #{custom_bert_forward.3} parent=1 // pred_region
      %137 = vsyncadd [#allocation3], 0
      %s139 = sshll.u32 [#allocation2], 4
      %s140 = int_to_ptr.vmem [resolvable:$true] %s139
      %s141 = sshll.u32 %s6, 4
      %s142 = int_to_ptr.hbm [resolvable:$true] %s141
      %144 = dma.vmem_to_hbm [thread:$0]  %s140, 32, %s142, [#allocation3]
    $region29: #{custom_bert_forward.3} parent=1 // pred_fallthru
      _
    // Predicated region
    $region30: #{custom_bert_forward.3} parent=1 // pred_check
      _
    $region31: #{custom_bert_forward.3} parent=1 // pred_check_branch
      %146 = sbr.rel (0) target = $region33
    $region32: #{custom_bert_forward.3} parent=1 // pred_region
      _
    $region33: #{custom_bert_forward.3} parent=1 // pred_fallthru
      _
    // Predicated region
    $region34: #{custom_bert_forward.3} parent=1 // pred_check
      _
    $region35: #{custom_bert_forward.3} parent=1 // pred_check_branch
      %148 = sbr.rel (0) target = $region37
    $region36: #{custom_bert_forward.3} parent=1 // pred_region
      %150 = dma.done [#allocation3], 32
    $region37: #{custom_bert_forward.3} parent=1 // pred_fallthru
      _
    // Predicated region
    $region38: #{custom_bert_forward.3} parent=1 // pred_check
      _
    $region39: #{custom_bert_forward.3} parent=1 // pred_check_branch
      %152 = sbr.rel (0) target = $region41
    $region40: #{custom_bert_forward.3} parent=1 // pred_region
      _
    $region41: #{custom_bert_forward.3} parent=1 // pred_fallthru
      _
    %153 = vsyncpa [#allocation3], 1

// kernel: custom_bert_forward.2
$region0: #{custom_bert_forward.2}
  #allocation0 [shape = 'u32[]', space=smem, size = 0x4, offset = 0x4, fixed_abs, tag = 'smem constant byte address 0x4 - core index']
  #allocation1 [shape = 'u32[72,128]{1,0:T(1,128)}', space=vmem, size = 0x9000, scoped, tag = 'internal scratch']
  %s0 = inlined_call_operand.vmem [shape: f32[2,8], index: 0, kind: input, shape index: {}]
  %s1 = inlined_call_operand.vmem [shape: f32[16,32], index: 1, kind: input, shape index: {}]
  %s2 = inlined_call_operand.vmem [shape: f32[1,32], index: 2, kind: input, shape index: {}]
  %s3 = inlined_call_operand.vmem [shape: f32[1,32], index: 3, kind: input, shape index: {}]
  %s4 = inlined_call_operand.vmem [shape: bf16[2,32,96], index: 4, kind: input, shape index: {}]
  %s5 = inlined_call_operand.vmem [shape: f32[2,1,96], index: 5, kind: input, shape index: {}]
  %s6 = inlined_call_operand.vmem [shape: bf16[2,32,32], index: 6, kind: input, shape index: {}]
  %s7 = inlined_call_operand.vmem [shape: f32[2,1,32], index: 7, kind: input, shape index: {}]
  %s8 = inlined_call_operand.vmem [shape: f32[2,1,32], index: 8, kind: input, shape index: {}]
  %s9 = inlined_call_operand.vmem [shape: f32[2,1,32], index: 9, kind: input, shape index: {}]
  %s10 = inlined_call_operand.vmem [shape: bf16[2,32,128], index: 10, kind: input, shape index: {}]
  %s11 = inlined_call_operand.vmem [shape: f32[2,1,128], index: 11, kind: input, shape index: {}]
  %s12 = inlined_call_operand.vmem [shape: bf16[2,128,32], index: 12, kind: input, shape index: {}]
  %s13 = inlined_call_operand.vmem [shape: f32[2,1,32], index: 13, kind: input, shape index: {}]
  %s14 = inlined_call_operand.vmem [shape: f32[2,1,32], index: 14, kind: input, shape index: {}]
  %s15 = inlined_call_operand.vmem [shape: f32[2,1,32], index: 15, kind: input, shape index: {}]
  %s16 = inlined_call_operand.vmem [shape: f32[16,32], index: 16, kind: output, shape index: {}]
  %s17 = sld [smem:[#allocation0]]
  $region101: #{custom_bert_forward.2} parent=0
    _
  %s19 = ssub.s32 1, %s17
  %s20 = scalar_select 0, %s19, %s17
  loop: start=0, step=1, limit=4
  $region2: #{custom_bert_forward.2} parent=0 // loop_pre_header
    _
  $region3: #{custom_bert_forward.2} parent=0 // loop_header
    %s22 = sphi 0, %s26
    %p23 = scmp.ge.s32.totalorder %s22, 4
    %s30 = sphi 0, %s30
    %s32 = sphi 0, %s30
    %s33 = sphi 0, %s32
    %s47 = sphi 0, %s33
    %s51 = sphi 0, %s51
    %s53 = sphi 0, %s51
    %s54 = sphi 0, %s53
    %s68 = sphi 0, %s54
    %s72 = sphi 0, %s72
    %s74 = sphi 0, %s72
    %s75 = sphi 0, %s74
    %s89 = sphi 0, %s75
    %s93 = sphi 0, %s93
    %s95 = sphi 0, %s93
    %s96 = sphi 0, %s95
    %s110 = sphi 0, %s96
    %s116 = sphi 0, %s118
    %s119 = sphi 0, %s116
    %s120 = sphi 0, %s119
    %s136 = sphi 0, %s120
    %s142 = sphi 0, %s144
    %s145 = sphi 0, %s142
    %s146 = sphi 0, %s145
    %s162 = sphi 0, %s146
    %s168 = sphi 0, %s170
    %s171 = sphi 0, %s168
    %s172 = sphi 0, %s171
    %s188 = sphi 0, %s172
    %s194 = sphi 0, %s196
    %s197 = sphi 0, %s194
    %s198 = sphi 0, %s197
    %s214 = sphi 0, %s198
    %s220 = sphi 0, %s222
    %s223 = sphi 0, %s220
    %s224 = sphi 0, %s223
    %s240 = sphi 0, %s224
    %s246 = sphi 0, %s248
    %s249 = sphi 0, %s246
    %s250 = sphi 0, %s249
    %s266 = sphi 0, %s250
    %s272 = sphi 0, %s274
    %s275 = sphi 0, %s272
    %s276 = sphi 0, %s275
    %s292 = sphi 0, %s276
    %s298 = sphi 0, %s300
    %s301 = sphi 0, %s298
    %s302 = sphi 0, %s301
    %s318 = sphi 0, %s302
    %s324 = sphi 0, %s326
    %s327 = sphi 0, %s324
    %s328 = sphi 0, %s327
    %s344 = sphi 0, %s328
    %s350 = sphi 0, %s352
    %s353 = sphi 0, %s350
    %s354 = sphi 0, %s353
    %s370 = sphi 0, %s354
    %s376 = sphi 0, %s378
    %s379 = sphi 0, %s376
    %s380 = sphi 0, %s379
    %s396 = sphi 0, %s380
    %s402 = sphi 0, %s404
    %s405 = sphi 0, %s402
    %s406 = sphi 0, %s405
    %s422 = sphi 0, %s406
    %s426 = sphi 0, %s426
    %s428 = sphi 0, %s426
    %s429 = sphi 0, %s428
    %s443 = sphi 0, %s429
  $region4: #{custom_bert_forward.2} parent=0 // loop_header_branch
    %25 = sbr.rel (%p23) target = $region8
  $region5: #{custom_bert_forward.2} parent=0 // loop_body
    %s27 = ssub.s32 %s22, 1
    %s28 = ssub.s32 %s22, 2
    %s29 = sadd.s32 %s22, 1
    %s31 = sadd.s32 %s30, 1
    %p34 = scmp.eq.s32.totalorder %s22, 1
    %p35 = scmp.ne.s32.totalorder %s30, %s32
    %p36 = scmp.eq.s32.totalorder %s22, 0
    %p37 = por %p35, %p36
    %p38 = scmp.ne.s32.totalorder %s30, %s32
    %p39 = scmp.eq.s32.totalorder %s27, 1
    %p40 = por %p38, %p39
    %p41 = scmp.ne.s32.totalorder %s32, %s33
    %p42 = scmp.eq.s32.totalorder %s27, 0
    %p43 = por %p41, %p42
    %p44 = scmp.ne.s32.totalorder %s32, %s33
    %p45 = scmp.eq.s32.totalorder %s28, 1
    %p46 = por %p44, %p45
    %p48 = scmp.ne.s32.totalorder %s33, %s47
    %p49 = scmp.eq.s32.totalorder %s28, 0
    %p50 = por %p48, %p49
    %s52 = sadd.s32 %s51, 1
    %p55 = scmp.eq.s32.totalorder %s22, 1
    %p56 = scmp.ne.s32.totalorder %s51, %s53
    %p57 = scmp.eq.s32.totalorder %s22, 0
    %p58 = por %p56, %p57
    %p59 = scmp.ne.s32.totalorder %s51, %s53
    %p60 = scmp.eq.s32.totalorder %s27, 1
    %p61 = por %p59, %p60
    %p62 = scmp.ne.s32.totalorder %s53, %s54
    %p63 = scmp.eq.s32.totalorder %s27, 0
    %p64 = por %p62, %p63
    %p65 = scmp.ne.s32.totalorder %s53, %s54
    %p66 = scmp.eq.s32.totalorder %s28, 1
    %p67 = por %p65, %p66
    %p69 = scmp.ne.s32.totalorder %s54, %s68
    %p70 = scmp.eq.s32.totalorder %s28, 0
    %p71 = por %p69, %p70
    %s73 = sadd.s32 %s72, 1
    %p76 = scmp.eq.s32.totalorder %s22, 1
    %p77 = scmp.ne.s32.totalorder %s72, %s74
    %p78 = scmp.eq.s32.totalorder %s22, 0
    %p79 = por %p77, %p78
    %p80 = scmp.ne.s32.totalorder %s72, %s74
    %p81 = scmp.eq.s32.totalorder %s27, 1
    %p82 = por %p80, %p81
    %p83 = scmp.ne.s32.totalorder %s74, %s75
    %p84 = scmp.eq.s32.totalorder %s27, 0
    %p85 = por %p83, %p84
    %p86 = scmp.ne.s32.totalorder %s74, %s75
    %p87 = scmp.eq.s32.totalorder %s28, 1
    %p88 = por %p86, %p87
    %p90 = scmp.ne.s32.totalorder %s75, %s89
    %p91 = scmp.eq.s32.totalorder %s28, 0
    %p92 = por %p90, %p91
    %s94 = sadd.s32 %s93, 1
    %p97 = scmp.eq.s32.totalorder %s22, 1
    %p98 = scmp.ne.s32.totalorder %s93, %s95
    %p99 = scmp.eq.s32.totalorder %s22, 0
    %p100 = por %p98, %p99
    %p101 = scmp.ne.s32.totalorder %s93, %s95
    %p102 = scmp.eq.s32.totalorder %s27, 1
    %p103 = por %p101, %p102
    %p104 = scmp.ne.s32.totalorder %s95, %s96
    %p105 = scmp.eq.s32.totalorder %s27, 0
    %p106 = por %p104, %p105
    %p107 = scmp.ne.s32.totalorder %s95, %s96
    %p108 = scmp.eq.s32.totalorder %s28, 1
    %p109 = por %p107, %p108
    %p111 = scmp.ne.s32.totalorder %s96, %s110
    %p112 = scmp.eq.s32.totalorder %s28, 0
    %p113 = por %p111, %p112
    %s114 = ssub.s32 %s22, %s29
    %p115 = scmp.eq.s32.totalorder %s114, 0
    %s117 = sadd.s32 %s116, 1
    %s118 = scalar_select %p115, %s116, %s117
    %p121 = pneg %p115
    %p122 = scmp.eq.s32.totalorder %s22, 1
    %p123 = por %p121, %p122
    %p124 = scmp.ne.s32.totalorder %s116, %s119
    %p125 = scmp.eq.s32.totalorder %s22, 0
    %p126 = por %p124, %p125
    %p127 = scmp.ne.s32.totalorder %s116, %s119
    %p128 = scmp.eq.s32.totalorder %s27, 1
    %p129 = por %p127, %p128
    %p130 = scmp.ne.s32.totalorder %s119, %s120
    %p131 = scmp.eq.s32.totalorder %s27, 0
    %p132 = por %p130, %p131
    %p133 = scmp.ne.s32.totalorder %s119, %s120
    %p134 = scmp.eq.s32.totalorder %s28, 1
    %p135 = por %p133, %p134
    %p137 = scmp.ne.s32.totalorder %s120, %s136
    %p138 = scmp.eq.s32.totalorder %s28, 0
    %p139 = por %p137, %p138
    %s140 = ssub.s32 %s22, %s29
    %p141 = scmp.eq.s32.totalorder %s140, 0
    %s143 = sadd.s32 %s142, 1
    %s144 = scalar_select %p141, %s142, %s143
    %p147 = pneg %p141
    %p148 = scmp.eq.s32.totalorder %s22, 1
    %p149 = por %p147, %p148
    %p150 = scmp.ne.s32.totalorder %s142, %s145
    %p151 = scmp.eq.s32.totalorder %s22, 0
    %p152 = por %p150, %p151
    %p153 = scmp.ne.s32.totalorder %s142, %s145
    %p154 = scmp.eq.s32.totalorder %s27, 1
    %p155 = por %p153, %p154
    %p156 = scmp.ne.s32.totalorder %s145, %s146
    %p157 = scmp.eq.s32.totalorder %s27, 0
    %p158 = por %p156, %p157
    %p159 = scmp.ne.s32.totalorder %s145, %s146
    %p160 = scmp.eq.s32.totalorder %s28, 1
    %p161 = por %p159, %p160
    %p163 = scmp.ne.s32.totalorder %s146, %s162
    %p164 = scmp.eq.s32.totalorder %s28, 0
    %p165 = por %p163, %p164
    %s166 = ssub.s32 %s22, %s29
    %p167 = scmp.eq.s32.totalorder %s166, 0
    %s169 = sadd.s32 %s168, 1
    %s170 = scalar_select %p167, %s168, %s169
    %p173 = pneg %p167
    %p174 = scmp.eq.s32.totalorder %s22, 1
    %p175 = por %p173, %p174
    %p176 = scmp.ne.s32.totalorder %s168, %s171
    %p177 = scmp.eq.s32.totalorder %s22, 0
    %p178 = por %p176, %p177
    %p179 = scmp.ne.s32.totalorder %s168, %s171
    %p180 = scmp.eq.s32.totalorder %s27, 1
    %p181 = por %p179, %p180
    %p182 = scmp.ne.s32.totalorder %s171, %s172
    %p183 = scmp.eq.s32.totalorder %s27, 0
    %p184 = por %p182, %p183
    %p185 = scmp.ne.s32.totalorder %s171, %s172
    %p186 = scmp.eq.s32.totalorder %s28, 1
    %p187 = por %p185, %p186
    %p189 = scmp.ne.s32.totalorder %s172, %s188
    %p190 = scmp.eq.s32.totalorder %s28, 0
    %p191 = por %p189, %p190
    %s192 = ssub.s32 %s22, %s29
    %p193 = scmp.eq.s32.totalorder %s192, 0
    %s195 = sadd.s32 %s194, 1
    %s196 = scalar_select %p193, %s194, %s195
    %p199 = pneg %p193
    %p200 = scmp.eq.s32.totalorder %s22, 1
    %p201 = por %p199, %p200
    %p202 = scmp.ne.s32.totalorder %s194, %s197
    %p203 = scmp.eq.s32.totalorder %s22, 0
    %p204 = por %p202, %p203
    %p205 = scmp.ne.s32.totalorder %s194, %s197
    %p206 = scmp.eq.s32.totalorder %s27, 1
    %p207 = por %p205, %p206
    %p208 = scmp.ne.s32.totalorder %s197, %s198
    %p209 = scmp.eq.s32.totalorder %s27, 0
    %p210 = por %p208, %p209
    %p211 = scmp.ne.s32.totalorder %s197, %s198
    %p212 = scmp.eq.s32.totalorder %s28, 1
    %p213 = por %p211, %p212
    %p215 = scmp.ne.s32.totalorder %s198, %s214
    %p216 = scmp.eq.s32.totalorder %s28, 0
    %p217 = por %p215, %p216
    %s218 = ssub.s32 %s22, %s29
    %p219 = scmp.eq.s32.totalorder %s218, 0
    %s221 = sadd.s32 %s220, 1
    %s222 = scalar_select %p219, %s220, %s221
    %p225 = pneg %p219
    %p226 = scmp.eq.s32.totalorder %s22, 1
    %p227 = por %p225, %p226
    %p228 = scmp.ne.s32.totalorder %s220, %s223
    %p229 = scmp.eq.s32.totalorder %s22, 0
    %p230 = por %p228, %p229
    %p231 = scmp.ne.s32.totalorder %s220, %s223
    %p232 = scmp.eq.s32.totalorder %s27, 1
    %p233 = por %p231, %p232
    %p234 = scmp.ne.s32.totalorder %s223, %s224
    %p235 = scmp.eq.s32.totalorder %s27, 0
    %p236 = por %p234, %p235
    %p237 = scmp.ne.s32.totalorder %s223, %s224
    %p238 = scmp.eq.s32.totalorder %s28, 1
    %p239 = por %p237, %p238
    %p241 = scmp.ne.s32.totalorder %s224, %s240
    %p242 = scmp.eq.s32.totalorder %s28, 0
    %p243 = por %p241, %p242
    %s244 = ssub.s32 %s22, %s29
    %p245 = scmp.eq.s32.totalorder %s244, 0
    %s247 = sadd.s32 %s246, 1
    %s248 = scalar_select %p245, %s246, %s247
    %p251 = pneg %p245
    %p252 = scmp.eq.s32.totalorder %s22, 1
    %p253 = por %p251, %p252
    %p254 = scmp.ne.s32.totalorder %s246, %s249
    %p255 = scmp.eq.s32.totalorder %s22, 0
    %p256 = por %p254, %p255
    %p257 = scmp.ne.s32.totalorder %s246, %s249
    %p258 = scmp.eq.s32.totalorder %s27, 1
    %p259 = por %p257, %p258
    %p260 = scmp.ne.s32.totalorder %s249, %s250
    %p261 = scmp.eq.s32.totalorder %s27, 0
    %p262 = por %p260, %p261
    %p263 = scmp.ne.s32.totalorder %s249, %s250
    %p264 = scmp.eq.s32.totalorder %s28, 1
    %p265 = por %p263, %p264
    %p267 = scmp.ne.s32.totalorder %s250, %s266
    %p268 = scmp.eq.s32.totalorder %s28, 0
    %p269 = por %p267, %p268
    %s270 = ssub.s32 %s22, %s29
    %p271 = scmp.eq.s32.totalorder %s270, 0
    %s273 = sadd.s32 %s272, 1
    %s274 = scalar_select %p271, %s272, %s273
    %p277 = pneg %p271
    %p278 = scmp.eq.s32.totalorder %s22, 1
    %p279 = por %p277, %p278
    %p280 = scmp.ne.s32.totalorder %s272, %s275
    %p281 = scmp.eq.s32.totalorder %s22, 0
    %p282 = por %p280, %p281
    %p283 = scmp.ne.s32.totalorder %s272, %s275
    %p284 = scmp.eq.s32.totalorder %s27, 1
    %p285 = por %p283, %p284
    %p286 = scmp.ne.s32.totalorder %s275, %s276
    %p287 = scmp.eq.s32.totalorder %s27, 0
    %p288 = por %p286, %p287
    %p289 = scmp.ne.s32.totalorder %s275, %s276
    %p290 = scmp.eq.s32.totalorder %s28, 1
    %p291 = por %p289, %p290
    %p293 = scmp.ne.s32.totalorder %s276, %s292
    %p294 = scmp.eq.s32.totalorder %s28, 0
    %p295 = por %p293, %p294
    %s296 = ssub.s32 %s22, %s29
    %p297 = scmp.eq.s32.totalorder %s296, 0
    %s299 = sadd.s32 %s298, 1
    %s300 = scalar_select %p297, %s298, %s299
    %p303 = pneg %p297
    %p304 = scmp.eq.s32.totalorder %s22, 1
    %p305 = por %p303, %p304
    %p306 = scmp.ne.s32.totalorder %s298, %s301
    %p307 = scmp.eq.s32.totalorder %s22, 0
    %p308 = por %p306, %p307
    %p309 = scmp.ne.s32.totalorder %s298, %s301
    %p310 = scmp.eq.s32.totalorder %s27, 1
    %p311 = por %p309, %p310
    %p312 = scmp.ne.s32.totalorder %s301, %s302
    %p313 = scmp.eq.s32.totalorder %s27, 0
    %p314 = por %p312, %p313
    %p315 = scmp.ne.s32.totalorder %s301, %s302
    %p316 = scmp.eq.s32.totalorder %s28, 1
    %p317 = por %p315, %p316
    %p319 = scmp.ne.s32.totalorder %s302, %s318
    %p320 = scmp.eq.s32.totalorder %s28, 0
    %p321 = por %p319, %p320
    %s322 = ssub.s32 %s22, %s29
    %p323 = scmp.eq.s32.totalorder %s322, 0
    %s325 = sadd.s32 %s324, 1
    %s326 = scalar_select %p323, %s324, %s325
    %p329 = pneg %p323
    %p330 = scmp.eq.s32.totalorder %s22, 1
    %p331 = por %p329, %p330
    %p332 = scmp.ne.s32.totalorder %s324, %s327
    %p333 = scmp.eq.s32.totalorder %s22, 0
    %p334 = por %p332, %p333
    %p335 = scmp.ne.s32.totalorder %s324, %s327
    %p336 = scmp.eq.s32.totalorder %s27, 1
    %p337 = por %p335, %p336
    %p338 = scmp.ne.s32.totalorder %s327, %s328
    %p339 = scmp.eq.s32.totalorder %s27, 0
    %p340 = por %p338, %p339
    %p341 = scmp.ne.s32.totalorder %s327, %s328
    %p342 = scmp.eq.s32.totalorder %s28, 1
    %p343 = por %p341, %p342
    %p345 = scmp.ne.s32.totalorder %s328, %s344
    %p346 = scmp.eq.s32.totalorder %s28, 0
    %p347 = por %p345, %p346
    %s348 = ssub.s32 %s22, %s29
    %p349 = scmp.eq.s32.totalorder %s348, 0
    %s351 = sadd.s32 %s350, 1
    %s352 = scalar_select %p349, %s350, %s351
    %p355 = pneg %p349
    %p356 = scmp.eq.s32.totalorder %s22, 1
    %p357 = por %p355, %p356
    %p358 = scmp.ne.s32.totalorder %s350, %s353
    %p359 = scmp.eq.s32.totalorder %s22, 0
    %p360 = por %p358, %p359
    %p361 = scmp.ne.s32.totalorder %s350, %s353
    %p362 = scmp.eq.s32.totalorder %s27, 1
    %p363 = por %p361, %p362
    %p364 = scmp.ne.s32.totalorder %s353, %s354
    %p365 = scmp.eq.s32.totalorder %s27, 0
    %p366 = por %p364, %p365
    %p367 = scmp.ne.s32.totalorder %s353, %s354
    %p368 = scmp.eq.s32.totalorder %s28, 1
    %p369 = por %p367, %p368
    %p371 = scmp.ne.s32.totalorder %s354, %s370
    %p372 = scmp.eq.s32.totalorder %s28, 0
    %p373 = por %p371, %p372
    %s374 = ssub.s32 %s22, %s29
    %p375 = scmp.eq.s32.totalorder %s374, 0
    %s377 = sadd.s32 %s376, 1
    %s378 = scalar_select %p375, %s376, %s377
    %p381 = pneg %p375
    %p382 = scmp.eq.s32.totalorder %s22, 1
    %p383 = por %p381, %p382
    %p384 = scmp.ne.s32.totalorder %s376, %s379
    %p385 = scmp.eq.s32.totalorder %s22, 0
    %p386 = por %p384, %p385
    %p387 = scmp.ne.s32.totalorder %s376, %s379
    %p388 = scmp.eq.s32.totalorder %s27, 1
    %p389 = por %p387, %p388
    %p390 = scmp.ne.s32.totalorder %s379, %s380
    %p391 = scmp.eq.s32.totalorder %s27, 0
    %p392 = por %p390, %p391
    %p393 = scmp.ne.s32.totalorder %s379, %s380
    %p394 = scmp.eq.s32.totalorder %s28, 1
    %p395 = por %p393, %p394
    %p397 = scmp.ne.s32.totalorder %s380, %s396
    %p398 = scmp.eq.s32.totalorder %s28, 0
    %p399 = por %p397, %p398
    %s400 = ssub.s32 %s22, %s29
    %p401 = scmp.eq.s32.totalorder %s400, 0
    %s403 = sadd.s32 %s402, 1
    %s404 = scalar_select %p401, %s402, %s403
    %p407 = pneg %p401
    %p408 = scmp.eq.s32.totalorder %s22, 1
    %p409 = por %p407, %p408
    %p410 = scmp.ne.s32.totalorder %s402, %s405
    %p411 = scmp.eq.s32.totalorder %s22, 0
    %p412 = por %p410, %p411
    %p413 = scmp.ne.s32.totalorder %s402, %s405
    %p414 = scmp.eq.s32.totalorder %s27, 1
    %p415 = por %p413, %p414
    %p416 = scmp.ne.s32.totalorder %s405, %s406
    %p417 = scmp.eq.s32.totalorder %s27, 0
    %p418 = por %p416, %p417
    %p419 = scmp.ne.s32.totalorder %s405, %s406
    %p420 = scmp.eq.s32.totalorder %s28, 1
    %p421 = por %p419, %p420
    %p423 = scmp.ne.s32.totalorder %s406, %s422
    %p424 = scmp.eq.s32.totalorder %s28, 0
    %p425 = por %p423, %p424
    %s427 = sadd.s32 %s426, 1
    %p430 = scmp.eq.s32.totalorder %s22, 1
    %p431 = scmp.ne.s32.totalorder %s426, %s428
    %p432 = scmp.eq.s32.totalorder %s22, 0
    %p433 = por %p431, %p432
    %p434 = scmp.ne.s32.totalorder %s426, %s428
    %p435 = scmp.eq.s32.totalorder %s27, 1
    %p436 = por %p434, %p435
    %p437 = scmp.ne.s32.totalorder %s428, %s429
    %p438 = scmp.eq.s32.totalorder %s27, 0
    %p439 = por %p437, %p438
    %p440 = scmp.ne.s32.totalorder %s428, %s429
    %p441 = scmp.eq.s32.totalorder %s28, 1
    %p442 = por %p440, %p441
    %p444 = scmp.ne.s32.totalorder %s429, %s443
    %p445 = scmp.eq.s32.totalorder %s28, 0
    %p446 = por %p444, %p445
    %p447 = scmp.le.s32.totalorder 1, %s22
    %p448 = scmp.lt.s32.totalorder %s22, 3
    %p449 = pnand %p447, %p448
    %p450 = pneg %p449
    // Predicated region
    $region9: #{custom_bert_forward.2} parent=5 // pred_check
      _
    $region10: #{custom_bert_forward.2} parent=5 // pred_check_branch
      %452 = sbr.rel (%p449) target = $region12
    $region11: #{custom_bert_forward.2} parent=5 // pred_region
      %s453 = ssub.s32 %s22, 1
      // Predicated region
      $region13: #{custom_bert_forward.2} parent=11 // pred_check
        %p454 = pneg %p43
      $region14: #{custom_bert_forward.2} parent=11 // pred_check_branch
        %456 = sbr.rel (%p454) target = $region16
      $region15: #{custom_bert_forward.2} parent=11 // pred_region
        _
      $region16: #{custom_bert_forward.2} parent=11 // pred_fallthru
        _
      // Predicated region
      $region17: #{custom_bert_forward.2} parent=11 // pred_check
        %p457 = pneg %p64
      $region18: #{custom_bert_forward.2} parent=11 // pred_check_branch
        %459 = sbr.rel (%p457) target = $region20
      $region19: #{custom_bert_forward.2} parent=11 // pred_region
        _
      $region20: #{custom_bert_forward.2} parent=11 // pred_fallthru
        _
      // Predicated region
      $region21: #{custom_bert_forward.2} parent=11 // pred_check
        %p460 = pneg %p85
      $region22: #{custom_bert_forward.2} parent=11 // pred_check_branch
        %462 = sbr.rel (%p460) target = $region24
      $region23: #{custom_bert_forward.2} parent=11 // pred_region
        _
      $region24: #{custom_bert_forward.2} parent=11 // pred_fallthru
        _
      // Predicated region
      $region25: #{custom_bert_forward.2} parent=11 // pred_check
        %p463 = pneg %p106
      $region26: #{custom_bert_forward.2} parent=11 // pred_check_branch
        %465 = sbr.rel (%p463) target = $region28
      $region27: #{custom_bert_forward.2} parent=11 // pred_region
        _
      $region28: #{custom_bert_forward.2} parent=11 // pred_fallthru
        _
    $region12: #{custom_bert_forward.2} parent=5 // pred_fallthru
      _
    %p466 = scmp.lt.s32.totalorder %s22, 2
    // Predicated region
    $region29: #{custom_bert_forward.2} parent=5 // pred_check
      %p467 = pneg %p466
    $region30: #{custom_bert_forward.2} parent=5 // pred_check_branch
      %469 = sbr.rel (%p467) target = $region32
    $region31: #{custom_bert_forward.2} parent=5 // pred_region
      // Predicated region
      $region33: #{custom_bert_forward.2} parent=31 // pred_check
        %p470 = pneg %p126
      $region34: #{custom_bert_forward.2} parent=31 // pred_check_branch
        %472 = sbr.rel (%p470) target = $region36
      $region35: #{custom_bert_forward.2} parent=31 // pred_region
        %p473 = scmp.lt.s32.totalorder %s22, 1
        %s474 = scalar_select %p473, %s22, 1
        %s475 = smul.addr %s474, 4
        %s476 = smul.addr %s475, 4
        %s477 = scalar_lea.vmem %s4, %s476
      $region36: #{custom_bert_forward.2} parent=31 // pred_fallthru
        _
      // Predicated region
      $region37: #{custom_bert_forward.2} parent=31 // pred_check
        %p478 = pneg %p152
      $region38: #{custom_bert_forward.2} parent=31 // pred_check_branch
        %480 = sbr.rel (%p478) target = $region40
      $region39: #{custom_bert_forward.2} parent=31 // pred_region
        %p481 = scmp.lt.s32.totalorder %s22, 1
        %s482 = scalar_select %p481, %s22, 1
        %s483 = scalar_lea.vmem %s5, %s482
      $region40: #{custom_bert_forward.2} parent=31 // pred_fallthru
        _
      // Predicated region
      $region41: #{custom_bert_forward.2} parent=31 // pred_check
        %p484 = pneg %p178
      $region42: #{custom_bert_forward.2} parent=31 // pred_check_branch
        %486 = sbr.rel (%p484) target = $region44
      $region43: #{custom_bert_forward.2} parent=31 // pred_region
        %p487 = scmp.lt.s32.totalorder %s22, 1
        %s488 = scalar_select %p487, %s22, 1
        %s489 = smul.addr %s488, 4
        %s490 = smul.addr %s489, 4
        %s491 = scalar_lea.vmem %s6, %s490
      $region44: #{custom_bert_forward.2} parent=31 // pred_fallthru
        _
      // Predicated region
      $region45: #{custom_bert_forward.2} parent=31 // pred_check
        %p492 = pneg %p204
      $region46: #{custom_bert_forward.2} parent=31 // pred_check_branch
        %494 = sbr.rel (%p492) target = $region48
      $region47: #{custom_bert_forward.2} parent=31 // pred_region
        %p495 = scmp.lt.s32.totalorder %s22, 1
        %s496 = scalar_select %p495, %s22, 1
        %s497 = scalar_lea.vmem %s7, %s496
      $region48: #{custom_bert_forward.2} parent=31 // pred_fallthru
        _
      // Predicated region
      $region49: #{custom_bert_forward.2} parent=31 // pred_check
        %p498 = pneg %p230
      $region50: #{custom_bert_forward.2} parent=31 // pred_check_branch
        %500 = sbr.rel (%p498) target = $region52
      $region51: #{custom_bert_forward.2} parent=31 // pred_region
        %p501 = scmp.lt.s32.totalorder %s22, 1
        %s502 = scalar_select %p501, %s22, 1
        %s503 = scalar_lea.vmem %s8, %s502
      $region52: #{custom_bert_forward.2} parent=31 // pred_fallthru
        _
      // Predicated region
      $region53: #{custom_bert_forward.2} parent=31 // pred_check
        %p504 = pneg %p256
      $region54: #{custom_bert_forward.2} parent=31 // pred_check_branch
        %506 = sbr.rel (%p504) target = $region56
      $region55: #{custom_bert_forward.2} parent=31 // pred_region
        %p507 = scmp.lt.s32.totalorder %s22, 1
        %s508 = scalar_select %p507, %s22, 1
        %s509 = scalar_lea.vmem %s9, %s508
      $region56: #{custom_bert_forward.2} parent=31 // pred_fallthru
        _
      // Predicated region
      $region57: #{custom_bert_forward.2} parent=31 // pred_check
        %p510 = pneg %p282
      $region58: #{custom_bert_forward.2} parent=31 // pred_check_branch
        %512 = sbr.rel (%p510) target = $region60
      $region59: #{custom_bert_forward.2} parent=31 // pred_region
        %p513 = scmp.lt.s32.totalorder %s22, 1
        %s514 = scalar_select %p513, %s22, 1
        %s515 = smul.addr %s514, 4
        %s516 = smul.addr %s515, 4
        %s517 = scalar_lea.vmem %s10, %s516
      $region60: #{custom_bert_forward.2} parent=31 // pred_fallthru
        _
      // Predicated region
      $region61: #{custom_bert_forward.2} parent=31 // pred_check
        %p518 = pneg %p308
      $region62: #{custom_bert_forward.2} parent=31 // pred_check_branch
        %520 = sbr.rel (%p518) target = $region64
      $region63: #{custom_bert_forward.2} parent=31 // pred_region
        %p521 = scmp.lt.s32.totalorder %s22, 1
        %s522 = scalar_select %p521, %s22, 1
        %s523 = scalar_lea.vmem %s11, %s522
      $region64: #{custom_bert_forward.2} parent=31 // pred_fallthru
        _
      // Predicated region
      $region65: #{custom_bert_forward.2} parent=31 // pred_check
        %p524 = pneg %p334
      $region66: #{custom_bert_forward.2} parent=31 // pred_check_branch
        %526 = sbr.rel (%p524) target = $region68
      $region67: #{custom_bert_forward.2} parent=31 // pred_region
        %p527 = scmp.lt.s32.totalorder %s22, 1
        %s528 = scalar_select %p527, %s22, 1
        %s529 = smul.addr %s528, 16
        %s530 = smul.addr %s529, 4
        %s531 = scalar_lea.vmem %s12, %s530
      $region68: #{custom_bert_forward.2} parent=31 // pred_fallthru
        _
      // Predicated region
      $region69: #{custom_bert_forward.2} parent=31 // pred_check
        %p532 = pneg %p360
      $region70: #{custom_bert_forward.2} parent=31 // pred_check_branch
        %534 = sbr.rel (%p532) target = $region72
      $region71: #{custom_bert_forward.2} parent=31 // pred_region
        %p535 = scmp.lt.s32.totalorder %s22, 1
        %s536 = scalar_select %p535, %s22, 1
        %s537 = scalar_lea.vmem %s13, %s536
      $region72: #{custom_bert_forward.2} parent=31 // pred_fallthru
        _
      // Predicated region
      $region73: #{custom_bert_forward.2} parent=31 // pred_check
        %p538 = pneg %p386
      $region74: #{custom_bert_forward.2} parent=31 // pred_check_branch
        %540 = sbr.rel (%p538) target = $region76
      $region75: #{custom_bert_forward.2} parent=31 // pred_region
        %p541 = scmp.lt.s32.totalorder %s22, 1
        %s542 = scalar_select %p541, %s22, 1
        %s543 = scalar_lea.vmem %s14, %s542
      $region76: #{custom_bert_forward.2} parent=31 // pred_fallthru
        _
      // Predicated region
      $region77: #{custom_bert_forward.2} parent=31 // pred_check
        %p544 = pneg %p412
      $region78: #{custom_bert_forward.2} parent=31 // pred_check_branch
        %546 = sbr.rel (%p544) target = $region80
      $region79: #{custom_bert_forward.2} parent=31 // pred_region
        %p547 = scmp.lt.s32.totalorder %s22, 1
        %s548 = scalar_select %p547, %s22, 1
        %s549 = scalar_lea.vmem %s15, %s548
      $region80: #{custom_bert_forward.2} parent=31 // pred_fallthru
        _
    $region32: #{custom_bert_forward.2} parent=5 // pred_fallthru
      _
    %p550 = scmp.le.s32.totalorder 1, %s22
    %p551 = scmp.lt.s32.totalorder %s22, 3
    %p552 = pnand %p550, %p551
    %p553 = pneg %p552
    // Predicated region
    $region81: #{custom_bert_forward.2} parent=5 // pred_check
      _
    $region82: #{custom_bert_forward.2} parent=5 // pred_check_branch
      %555 = sbr.rel (%p552) target = $region84
    $region83: #{custom_bert_forward.2} parent=5 // pred_region
      %s556 = ssub.s32 %s22, 1
      %p557 = pneg %p43
      %p558 = pneg %p40
      %p559 = pneg %p64
      %p560 = pneg %p61
      %p561 = pneg %p85
      %p562 = pneg %p82
      %p563 = pneg %p106
      %p564 = pneg %p103
      %p565 = scmp.lt.s32.totalorder %s27, 1
      %s566 = scalar_select %p565, %s27, 1
      %s567 = smul.addr %s566, 4
      %s568 = smul.addr %s567, 4
      %s569 = scalar_lea.vmem %s4, %s568
      %p570 = pneg %p132
      %p571 = pneg %p129
      %p572 = scmp.lt.s32.totalorder %s27, 1
      %s573 = scalar_select %p572, %s27, 1
      %s574 = scalar_lea.vmem %s5, %s573
      %p575 = pneg %p158
      %p576 = pneg %p155
      %p577 = scmp.lt.s32.totalorder %s27, 1
      %s578 = scalar_select %p577, %s27, 1
      %s579 = smul.addr %s578, 4
      %s580 = smul.addr %s579, 4
      %s581 = scalar_lea.vmem %s6, %s580
      %p582 = pneg %p184
      %p583 = pneg %p181
      %p584 = scmp.lt.s32.totalorder %s27, 1
      %s585 = scalar_select %p584, %s27, 1
      %s586 = scalar_lea.vmem %s7, %s585
      %p587 = pneg %p210
      %p588 = pneg %p207
      %p589 = scmp.lt.s32.totalorder %s27, 1
      %s590 = scalar_select %p589, %s27, 1
      %s591 = scalar_lea.vmem %s8, %s590
      %p592 = pneg %p236
      %p593 = pneg %p233
      %p594 = scmp.lt.s32.totalorder %s27, 1
      %s595 = scalar_select %p594, %s27, 1
      %s596 = scalar_lea.vmem %s9, %s595
      %p597 = pneg %p262
      %p598 = pneg %p259
      %p599 = scmp.lt.s32.totalorder %s27, 1
      %s600 = scalar_select %p599, %s27, 1
      %s601 = smul.addr %s600, 4
      %s602 = smul.addr %s601, 4
      %s603 = scalar_lea.vmem %s10, %s602
      %p604 = pneg %p288
      %p605 = pneg %p285
      %p606 = scmp.lt.s32.totalorder %s27, 1
      %s607 = scalar_select %p606, %s27, 1
      %s608 = scalar_lea.vmem %s11, %s607
      %p609 = pneg %p314
      %p610 = pneg %p311
      %p611 = scmp.lt.s32.totalorder %s27, 1
      %s612 = scalar_select %p611, %s27, 1
      %s613 = smul.addr %s612, 16
      %s614 = smul.addr %s613, 4
      %s615 = scalar_lea.vmem %s12, %s614
      %p616 = pneg %p340
      %p617 = pneg %p337
      %p618 = scmp.lt.s32.totalorder %s27, 1
      %s619 = scalar_select %p618, %s27, 1
      %s620 = scalar_lea.vmem %s13, %s619
      %p621 = pneg %p366
      %p622 = pneg %p363
      %p623 = scmp.lt.s32.totalorder %s27, 1
      %s624 = scalar_select %p623, %s27, 1
      %s625 = scalar_lea.vmem %s14, %s624
      %p626 = pneg %p392
      %p627 = pneg %p389
      %p628 = scmp.lt.s32.totalorder %s27, 1
      %s629 = scalar_select %p628, %s27, 1
      %s630 = scalar_lea.vmem %s15, %s629
      %p631 = pneg %p418
      %p632 = pneg %p415
      %p633 = pneg %p439
      %p634 = pneg %p436
      %p635 = scmp.lt.s32.totalorder %s27, 1
      %s636 = scalar_select %p635, %s27, 1
      %s637 = smul.addr %s636, 4
      %s638 = smul.addr %s637, 4
      %s639 = scalar_lea.vmem %s4, %s638
      %p640 = scmp.lt.s32.totalorder %s27, 1
      %s641 = scalar_select %p640, %s27, 1
      %s642 = scalar_lea.vmem %s5, %s641
      %p643 = scmp.lt.s32.totalorder %s27, 1
      %s644 = scalar_select %p643, %s27, 1
      %s645 = smul.addr %s644, 4
      %s646 = smul.addr %s645, 4
      %s647 = scalar_lea.vmem %s6, %s646
      %p648 = scmp.lt.s32.totalorder %s27, 1
      %s649 = scalar_select %p648, %s27, 1
      %s650 = scalar_lea.vmem %s7, %s649
      %p651 = scmp.lt.s32.totalorder %s27, 1
      %s652 = scalar_select %p651, %s27, 1
      %s653 = scalar_lea.vmem %s8, %s652
      %p654 = scmp.lt.s32.totalorder %s27, 1
      %s655 = scalar_select %p654, %s27, 1
      %s656 = scalar_lea.vmem %s9, %s655
      %p657 = scmp.lt.s32.totalorder %s27, 1
      %s658 = scalar_select %p657, %s27, 1
      %s659 = smul.addr %s658, 4
      %s660 = smul.addr %s659, 4
      %s661 = scalar_lea.vmem %s10, %s660
      %p662 = scmp.lt.s32.totalorder %s27, 1
      %s663 = scalar_select %p662, %s27, 1
      %s664 = scalar_lea.vmem %s11, %s663
      %p665 = scmp.lt.s32.totalorder %s27, 1
      %s666 = scalar_select %p665, %s27, 1
      %s667 = smul.addr %s666, 16
      %s668 = smul.addr %s667, 4
      %s669 = scalar_lea.vmem %s12, %s668
      %p670 = scmp.lt.s32.totalorder %s27, 1
      %s671 = scalar_select %p670, %s27, 1
      %s672 = scalar_lea.vmem %s13, %s671
      %p673 = scmp.lt.s32.totalorder %s27, 1
      %s674 = scalar_select %p673, %s27, 1
      %s675 = scalar_lea.vmem %s14, %s674
      %p676 = scmp.lt.s32.totalorder %s27, 1
      %s677 = scalar_select %p676, %s27, 1
      %s678 = scalar_lea.vmem %s15, %s677
      %p680 = scmp.eq.s32.totalorder %s27, 0
      // Predicated region
      $region85: #{custom_bert_forward.2} parent=83 // pred_check
        %p681 = pneg %p680
      $region86: #{custom_bert_forward.2} parent=83 // pred_check_branch
        %683 = sbr.rel (%p681) target = $region88
      $region87: #{custom_bert_forward.2} parent=83 // pred_region
        %v684 = vld [vmem:[%s1] sm:$0xff]
        %v685 = vld [vmem:[%s1 + $0x8] sm:$0xff]
        %v686 = vld [vmem:[%s2] sm:$0x1]
        %v687 = vld [vmem:[%s3] sm:$0x1]
        %vm688 = vcmask 261120
        %v689 = vsel %vm688, %v684, 0.0
        %690 = vadd.xlane.f32.xlu0 %v689
        %v691 = vpop.xlane.xlu0 %690
        %v692 = vsel %vm688, %v685, 0.0
        %693 = vadd.xlane.f32.xlu0 %v692
        %v694 = vpop.xlane.xlu0 %693
        %v695 = vrcp.pop 32.0
        %v696 = vmul.f32 32.0, %v695
        %v697 = vsub.f32 1.0, %v696
        %v698 = vmul.f32 %v695, %v697
        %v699 = vadd.f32 %v695, %v698
        %vm700 = vweird.f32 %v695
        %v701 = vsel %vm700, %v695, %v699
        %v702 = vmul.f32 %v691, %v701
        %v703 = vmul.f32 %v694, %v701
        %v704 = vsub.f32 %v684, %v702
        %v705 = vsub.f32 %v685, %v703
        %v706 = vmul.f32 %v704, %v704
        %v707 = vmul.f32 %v705, %v705
        %v708 = vsel %vm688, %v706, 0.0
        %709 = vadd.xlane.f32.xlu0 %v708
        %v710 = vpop.xlane.xlu0 %709
        %v711 = vsel %vm688, %v707, 0.0
        %712 = vadd.xlane.f32.xlu0 %v711
        %v713 = vpop.xlane.xlu0 %712
        %v714 = vmul.f32 %v710, %v701
        %v715 = vmul.f32 %v713, %v701
        %v716 = vadd.f32 %v714, 1e-12
        %v717 = vadd.f32 %v715, 1e-12
        %v718 = vrsqrt.pop %v716
        %v719 = vmul.f32 %v718, %v716
        %v720 = vmul.f32 %v719, %v718
        %v721 = vmul.f32 0.5, %v720
        %v722 = vsub.f32 1.5, %v721
        %v723 = vmul.f32 %v718, %v722
        %vm724 = vweird.f32 %v716
        %vm725 = vweird.f32 %v718
        %vm726 = vmor %vm724, %vm725
        %v727 = vsel %vm726, %v718, %v723
        %v728 = vrsqrt.pop %v717
        %v729 = vmul.f32 %v728, %v717
        %v730 = vmul.f32 %v729, %v728
        %v731 = vmul.f32 0.5, %v730
        %v732 = vsub.f32 1.5, %v731
        %v733 = vmul.f32 %v728, %v732
        %vm734 = vweird.f32 %v717
        %vm735 = vweird.f32 %v728
        %vm736 = vmor %vm734, %vm735
        %v737 = vsel %vm736, %v728, %v733
        %v738 = vmul.f32 %v704, %v727
        %v739 = vmul.f32 %v705, %v737
        %v741 = vperm.slane %v686, 0
        %v743 = vmul.f32 %v738, %v741
        %v744 = vmul.f32 %v739, %v741
        %v746 = vperm.slane %v687, 0
        %v748 = vadd.f32 %v743, %v746
        %v749 = vadd.f32 %v744, %v746
        %750 = vst.msk [vmem:[%s16] sm:$0xff] %vm688, %v748
        %751 = vst.msk [vmem:[%s16 + $0x8] sm:$0xff] %vm688, %v749
      $region88: #{custom_bert_forward.2} parent=83 // pred_fallthru
        _
      %v752 = vld [vmem:[%s16] sm:$0xff]
      %v753 = vld [vmem:[%s16 + $0x8] sm:$0xff]
      %v754 = vpack.c.bf16 %v753, %v752
      %v755 = vld [vmem:[%s639] sm:$0xf]
      %v756 = vld [vmem:[%s639 + $0x4] sm:$0xf]
      %v757 = vld [vmem:[%s639 + $0x8] sm:$0xf]
      %v758 = vld [vmem:[%s639 + $0xc] sm:$0xf]
      %v759 = vld [vmem:[%s642] sm:$0x1]
      %v761 = vperm.slane %v759, 0
      %v767 = vunpack.c.l.b16 %v755
      %v768 = vunpack.c.l.b16 %v756
      %v769 = vunpack.c.l.b16 %v757
      %v770 = vunpack.c.l.b16 %v758
      %v771 = vpack.c.b16 %v768, %v767
      %v772 = vpack.c.b16 %v770, %v769
      %vm775 = vcmask 261120
      %v777 = vsel %vm775, %v754, 0
      %779 = vmatpush.bf16.msra.mxu0 0
      %780 = vmatpush.bf16.msra.mxu0 0
      %781 = vmatpush.bf16.msra.mxu0 0
      %782 = vmatpush.bf16.msra.mxu0 0
      %783 = vmatpush.bf16.msra.mxu0 0
      %784 = vmatpush.bf16.msra.mxu0 0
      %785 = vmatpush.bf16.msra.mxu0 %v772
      %786 = vmatpush.bf16.msra.mxu0 %v771
      %787 = vmatmul.bf16.gmra.mxu0 %v777
      %v788 = vpop.f32.mrf.mxu0
      %v789 = vadd.f32 %v761, %v788
      %v790 = vpop.f32.mrf.mxu0
      %v791 = vadd.f32 %v761, %v790
      %792 = vdwg.mxu0
      %v793 = vld [vmem:[%s0] sm:$0x3]
      %v794 = vsub.f32 1.0, %v793
      %v795 = vmul.f32 %v794, -10000.0
      %v797 = vrot.slane %v795, 1
      %799 = vrot.lane.b32.xlu0 %v789, 96
      %v800 = vpop.permute.xlu0 %799
      %vm801 = vcmask 64512
      %v802 = vsel %vm801, %v789, 0
      %v804 = vsel %vm801, %v800, 0
      %806 = vmatpush.xpose.msra.mxu0 0.0
      %807 = vmatpush.xpose.msra.mxu0 0.0
      %808 = vmatpush.xpose.msra.mxu0 0.0
      %809 = vmatpush.xpose.msra.mxu0 0.0
      %810 = vmatpush.xpose.msra.mxu0 0.0
      %811 = vmatpush.xpose.msra.mxu0 0.0
      %812 = vmatpush.xpose.msra.mxu0 0.0
      %813 = vmatpush.xpose.msra.mxu0 0.0
      %814 = vmatpush.xpose.msra.mxu0 0.0
      %815 = vmatpush.xpose.msra.mxu0 0.0
      %816 = vmatpush.xpose.msra.mxu0 0.0
      %817 = vmatpush.xpose.msra.mxu0 0.0
      %818 = vmatpush.xpose.msra.mxu0 0.0
      %819 = vmatpush.xpose.msra.mxu0 0.0
      %820 = vmatpush.xpose.msra.mxu0 0.0
      %821 = vmatpush.xpose.msra.mxu0 %v804
      %822 = vmatmul.f32.gmra.mxu0 %v802
      %v823 = vpop.f32.mrf.mxu0
      %v824 = vadd.f32 0.0, %v823
      %825 = vdwg.mxu0
      %827 = vrot.lane.b32.xlu0 %v791, 96
      %v828 = vpop.permute.xlu0 %827
      %v829 = vsel %vm801, %v791, 0
      %v831 = vsel %vm801, %v828, 0
      %833 = vmatpush.xpose.msra.mxu0 0.0
      %834 = vmatpush.xpose.msra.mxu0 0.0
      %835 = vmatpush.xpose.msra.mxu0 0.0
      %836 = vmatpush.xpose.msra.mxu0 0.0
      %837 = vmatpush.xpose.msra.mxu0 0.0
      %838 = vmatpush.xpose.msra.mxu0 0.0
      %839 = vmatpush.xpose.msra.mxu0 0.0
      %840 = vmatpush.xpose.msra.mxu0 0.0
      %841 = vmatpush.xpose.msra.mxu0 0.0
      %842 = vmatpush.xpose.msra.mxu0 0.0
      %843 = vmatpush.xpose.msra.mxu0 0.0
      %844 = vmatpush.xpose.msra.mxu0 0.0
      %845 = vmatpush.xpose.msra.mxu0 0.0
      %846 = vmatpush.xpose.msra.mxu0 0.0
      %847 = vmatpush.xpose.msra.mxu0 0.0
      %848 = vmatpush.xpose.msra.mxu0 %v831
      %849 = vmatmul.f32.gmra.mxu0 %v829
      %v850 = vpop.f32.mrf.mxu0
      %v851 = vadd.f32 0.0, %v850
      %852 = vdwg.mxu0
      %v853 = vmul.f32 %v824, 0.35355338
      %v854 = vmul.f32 %v851, 0.35355338
      %v855 = vperm.slane %v795, 0
      %v856 = vperm.slane %v797, 0
      %v859 = vadd.f32 %v853, %v855
      %v860 = vadd.f32 %v854, %v856
      %v861 = vsel %vm801, %v859, -inf
      %862 = vmax.xlane.f32.xlu0 %v861
      %v863 = vpop.xlane.xlu0 %862
      %v864 = vsel %vm801, %v860, -inf
      %865 = vmax.xlane.f32.xlu0 %v864
      %v866 = vpop.xlane.xlu0 %865
      %v867 = vsub.f32 %v859, %v863
      %v868 = vsub.f32 %v860, %v866
      %v869 = vmul.f32 %v867, 1.442695
      %v870 = vpow.pop %v869
      %v871 = vmul.f32 %v868, 1.442695
      %v872 = vpow.pop %v871
      %v873 = vsel %vm801, %v870, 0.0
      %874 = vadd.xlane.f32.xlu0 %v873
      %v875 = vpop.xlane.xlu0 %874
      %v876 = vsel %vm801, %v872, 0.0
      %877 = vadd.xlane.f32.xlu0 %v876
      %v878 = vpop.xlane.xlu0 %877
      %v879 = vrcp.pop %v875
      %v880 = vrcp.pop %v878
      %v881 = vmul.f32 %v870, %v879
      %v882 = vmul.f32 %v872, %v880
      %883 = vrot.lane.b32.xlu0 %v789, 64
      %v884 = vpop.permute.xlu0 %883
      %v887 = vsel %vm801, %v881, 0
      %889 = vmatpush.msra.mxu0 0.0
      %890 = vmatpush.msra.mxu0 0.0
      %891 = vmatpush.msra.mxu0 0.0
      %892 = vmatpush.msra.mxu0 0.0
      %893 = vmatpush.msra.mxu0 0.0
      %894 = vmatpush.msra.mxu0 0.0
      %895 = vmatpush.msra.mxu0 0.0
      %896 = vmatpush.msra.mxu0 0.0
      %897 = vmatpush.msra.mxu0 0.0
      %898 = vmatpush.msra.mxu0 0.0
      %899 = vmatpush.msra.mxu0 0.0
      %900 = vmatpush.msra.mxu0 0.0
      %901 = vmatpush.msra.mxu0 0.0
      %902 = vmatpush.msra.mxu0 0.0
      %903 = vmatpush.msra.mxu0 0.0
      %904 = vmatpush.msra.mxu0 %v884
      %905 = vmatmul.f32.gmra.mxu0 %v887
      %v906 = vpop.f32.mrf.mxu0
      %v907 = vadd.f32 0.0, %v906
      %908 = vdwg.mxu0
      %909 = vrot.lane.b32.xlu0 %v791, 64
      %v910 = vpop.permute.xlu0 %909
      %v913 = vsel %vm801, %v882, 0
      %915 = vmatpush.msra.mxu0 0.0
      %916 = vmatpush.msra.mxu0 0.0
      %917 = vmatpush.msra.mxu0 0.0
      %918 = vmatpush.msra.mxu0 0.0
      %919 = vmatpush.msra.mxu0 0.0
      %920 = vmatpush.msra.mxu0 0.0
      %921 = vmatpush.msra.mxu0 0.0
      %922 = vmatpush.msra.mxu0 0.0
      %923 = vmatpush.msra.mxu0 0.0
      %924 = vmatpush.msra.mxu0 0.0
      %925 = vmatpush.msra.mxu0 0.0
      %926 = vmatpush.msra.mxu0 0.0
      %927 = vmatpush.msra.mxu0 0.0
      %928 = vmatpush.msra.mxu0 0.0
      %929 = vmatpush.msra.mxu0 0.0
      %930 = vmatpush.msra.mxu0 %v910
      %931 = vmatmul.f32.gmra.mxu0 %v913
      %v932 = vpop.f32.mrf.mxu0
      %v933 = vadd.f32 0.0, %v932
      %934 = vdwg.mxu0
      %935 = vrot.lane.b32.xlu0 %v789, 120
      %v936 = vpop.permute.xlu0 %935
      %937 = vrot.lane.b32.xlu0 %v789, 88
      %v938 = vpop.permute.xlu0 %937
      %v939 = vsel %vm801, %v936, 0
      %v941 = vsel %vm801, %v938, 0
      %943 = vmatpush.xpose.msra.mxu0 0.0
      %944 = vmatpush.xpose.msra.mxu0 0.0
      %945 = vmatpush.xpose.msra.mxu0 0.0
      %946 = vmatpush.xpose.msra.mxu0 0.0
      %947 = vmatpush.xpose.msra.mxu0 0.0
      %948 = vmatpush.xpose.msra.mxu0 0.0
      %949 = vmatpush.xpose.msra.mxu0 0.0
      %950 = vmatpush.xpose.msra.mxu0 0.0
      %951 = vmatpush.xpose.msra.mxu0 0.0
      %952 = vmatpush.xpose.msra.mxu0 0.0
      %953 = vmatpush.xpose.msra.mxu0 0.0
      %954 = vmatpush.xpose.msra.mxu0 0.0
      %955 = vmatpush.xpose.msra.mxu0 0.0
      %956 = vmatpush.xpose.msra.mxu0 0.0
      %957 = vmatpush.xpose.msra.mxu0 0.0
      %958 = vmatpush.xpose.msra.mxu0 %v941
      %959 = vmatmul.f32.gmra.mxu0 %v939
      %v960 = vpop.f32.mrf.mxu0
      %v961 = vadd.f32 0.0, %v960
      %962 = vdwg.mxu0
      %963 = vrot.lane.b32.xlu0 %v791, 120
      %v964 = vpop.permute.xlu0 %963
      %965 = vrot.lane.b32.xlu0 %v791, 88
      %v966 = vpop.permute.xlu0 %965
      %v967 = vsel %vm801, %v964, 0
      %v969 = vsel %vm801, %v966, 0
      %971 = vmatpush.xpose.msra.mxu0 0.0
      %972 = vmatpush.xpose.msra.mxu0 0.0
      %973 = vmatpush.xpose.msra.mxu0 0.0
      %974 = vmatpush.xpose.msra.mxu0 0.0
      %975 = vmatpush.xpose.msra.mxu0 0.0
      %976 = vmatpush.xpose.msra.mxu0 0.0
      %977 = vmatpush.xpose.msra.mxu0 0.0
      %978 = vmatpush.xpose.msra.mxu0 0.0
      %979 = vmatpush.xpose.msra.mxu0 0.0
      %980 = vmatpush.xpose.msra.mxu0 0.0
      %981 = vmatpush.xpose.msra.mxu0 0.0
      %982 = vmatpush.xpose.msra.mxu0 0.0
      %983 = vmatpush.xpose.msra.mxu0 0.0
      %984 = vmatpush.xpose.msra.mxu0 0.0
      %985 = vmatpush.xpose.msra.mxu0 0.0
      %986 = vmatpush.xpose.msra.mxu0 %v969
      %987 = vmatmul.f32.gmra.mxu0 %v967
      %v988 = vpop.f32.mrf.mxu0
      %v989 = vadd.f32 0.0, %v988
      %990 = vdwg.mxu0
      %v991 = vmul.f32 %v961, 0.35355338
      %v992 = vmul.f32 %v989, 0.35355338
      %v993 = vadd.f32 %v991, %v855
      %v994 = vadd.f32 %v992, %v856
      %v995 = vsel %vm801, %v993, -inf
      %996 = vmax.xlane.f32.xlu0 %v995
      %v997 = vpop.xlane.xlu0 %996
      %v998 = vsel %vm801, %v994, -inf
      %999 = vmax.xlane.f32.xlu0 %v998
      %v1000 = vpop.xlane.xlu0 %999
      %v1001 = vsub.f32 %v993, %v997
      %v1002 = vsub.f32 %v994, %v1000
      %v1003 = vmul.f32 %v1001, 1.442695
      %v1004 = vpow.pop %v1003
      %v1005 = vmul.f32 %v1002, 1.442695
      %v1006 = vpow.pop %v1005
      %v1007 = vsel %vm801, %v1004, 0.0
      %1008 = vadd.xlane.f32.xlu0 %v1007
      %v1009 = vpop.xlane.xlu0 %1008
      %v1010 = vsel %vm801, %v1006, 0.0
      %1011 = vadd.xlane.f32.xlu0 %v1010
      %v1012 = vpop.xlane.xlu0 %1011
      %v1013 = vrcp.pop %v1009
      %v1014 = vrcp.pop %v1012
      %v1015 = vmul.f32 %v1004, %v1013
      %v1016 = vmul.f32 %v1006, %v1014
      %1017 = vrot.lane.b32.xlu0 %v789, 56
      %v1018 = vpop.permute.xlu0 %1017
      %v1021 = vsel %vm801, %v1015, 0
      %1023 = vmatpush.msra.mxu0 0.0
      %1024 = vmatpush.msra.mxu0 0.0
      %1025 = vmatpush.msra.mxu0 0.0
      %1026 = vmatpush.msra.mxu0 0.0
      %1027 = vmatpush.msra.mxu0 0.0
      %1028 = vmatpush.msra.mxu0 0.0
      %1029 = vmatpush.msra.mxu0 0.0
      %1030 = vmatpush.msra.mxu0 0.0
      %1031 = vmatpush.msra.mxu0 0.0
      %1032 = vmatpush.msra.mxu0 0.0
      %1033 = vmatpush.msra.mxu0 0.0
      %1034 = vmatpush.msra.mxu0 0.0
      %1035 = vmatpush.msra.mxu0 0.0
      %1036 = vmatpush.msra.mxu0 0.0
      %1037 = vmatpush.msra.mxu0 0.0
      %1038 = vmatpush.msra.mxu0 %v1018
      %1039 = vmatmul.f32.gmra.mxu0 %v1021
      %v1040 = vpop.f32.mrf.mxu0
      %v1041 = vadd.f32 0.0, %v1040
      %1042 = vdwg.mxu0
      %1043 = vrot.lane.b32.xlu0 %v791, 56
      %v1044 = vpop.permute.xlu0 %1043
      %v1047 = vsel %vm801, %v1016, 0
      %1049 = vmatpush.msra.mxu0 0.0
      %1050 = vmatpush.msra.mxu0 0.0
      %1051 = vmatpush.msra.mxu0 0.0
      %1052 = vmatpush.msra.mxu0 0.0
      %1053 = vmatpush.msra.mxu0 0.0
      %1054 = vmatpush.msra.mxu0 0.0
      %1055 = vmatpush.msra.mxu0 0.0
      %1056 = vmatpush.msra.mxu0 0.0
      %1057 = vmatpush.msra.mxu0 0.0
      %1058 = vmatpush.msra.mxu0 0.0
      %1059 = vmatpush.msra.mxu0 0.0
      %1060 = vmatpush.msra.mxu0 0.0
      %1061 = vmatpush.msra.mxu0 0.0
      %1062 = vmatpush.msra.mxu0 0.0
      %1063 = vmatpush.msra.mxu0 0.0
      %1064 = vmatpush.msra.mxu0 %v1044
      %1065 = vmatmul.f32.gmra.mxu0 %v1047
      %v1066 = vpop.f32.mrf.mxu0
      %v1067 = vadd.f32 0.0, %v1066
      %1068 = vdwg.mxu0
      %1069 = vrot.lane.b32.xlu0 %v789, 112
      %v1070 = vpop.permute.xlu0 %1069
      %1071 = vrot.lane.b32.xlu0 %v789, 80
      %v1072 = vpop.permute.xlu0 %1071
      %v1073 = vsel %vm801, %v1070, 0
      %v1075 = vsel %vm801, %v1072, 0
      %1077 = vmatpush.xpose.msra.mxu0 0.0
      %1078 = vmatpush.xpose.msra.mxu0 0.0
      %1079 = vmatpush.xpose.msra.mxu0 0.0
      %1080 = vmatpush.xpose.msra.mxu0 0.0
      %1081 = vmatpush.xpose.msra.mxu0 0.0
      %1082 = vmatpush.xpose.msra.mxu0 0.0
      %1083 = vmatpush.xpose.msra.mxu0 0.0
      %1084 = vmatpush.xpose.msra.mxu0 0.0
      %1085 = vmatpush.xpose.msra.mxu0 0.0
      %1086 = vmatpush.xpose.msra.mxu0 0.0
      %1087 = vmatpush.xpose.msra.mxu0 0.0
      %1088 = vmatpush.xpose.msra.mxu0 0.0
      %1089 = vmatpush.xpose.msra.mxu0 0.0
      %1090 = vmatpush.xpose.msra.mxu0 0.0
      %1091 = vmatpush.xpose.msra.mxu0 0.0
      %1092 = vmatpush.xpose.msra.mxu0 %v1075
      %1093 = vmatmul.f32.gmra.mxu0 %v1073
      %v1094 = vpop.f32.mrf.mxu0
      %v1095 = vadd.f32 0.0, %v1094
      %1096 = vdwg.mxu0
      %1097 = vrot.lane.b32.xlu0 %v791, 112
      %v1098 = vpop.permute.xlu0 %1097
      %1099 = vrot.lane.b32.xlu0 %v791, 80
      %v1100 = vpop.permute.xlu0 %1099
      %v1101 = vsel %vm801, %v1098, 0
      %v1103 = vsel %vm801, %v1100, 0
      %1105 = vmatpush.xpose.msra.mxu0 0.0
      %1106 = vmatpush.xpose.msra.mxu0 0.0
      %1107 = vmatpush.xpose.msra.mxu0 0.0
      %1108 = vmatpush.xpose.msra.mxu0 0.0
      %1109 = vmatpush.xpose.msra.mxu0 0.0
      %1110 = vmatpush.xpose.msra.mxu0 0.0
      %1111 = vmatpush.xpose.msra.mxu0 0.0
      %1112 = vmatpush.xpose.msra.mxu0 0.0
      %1113 = vmatpush.xpose.msra.mxu0 0.0
      %1114 = vmatpush.xpose.msra.mxu0 0.0
      %1115 = vmatpush.xpose.msra.mxu0 0.0
      %1116 = vmatpush.xpose.msra.mxu0 0.0
      %1117 = vmatpush.xpose.msra.mxu0 0.0
      %1118 = vmatpush.xpose.msra.mxu0 0.0
      %1119 = vmatpush.xpose.msra.mxu0 0.0
      %1120 = vmatpush.xpose.msra.mxu0 %v1103
      %1121 = vmatmul.f32.gmra.mxu0 %v1101
      %v1122 = vpop.f32.mrf.mxu0
      %v1123 = vadd.f32 0.0, %v1122
      %1124 = vdwg.mxu0
      %v1125 = vmul.f32 %v1095, 0.35355338
      %v1126 = vmul.f32 %v1123, 0.35355338
      %v1127 = vadd.f32 %v1125, %v855
      %v1128 = vadd.f32 %v1126, %v856
      %v1129 = vsel %vm801, %v1127, -inf
      %1130 = vmax.xlane.f32.xlu0 %v1129
      %v1131 = vpop.xlane.xlu0 %1130
      %v1132 = vsel %vm801, %v1128, -inf
      %1133 = vmax.xlane.f32.xlu0 %v1132
      %v1134 = vpop.xlane.xlu0 %1133
      %v1135 = vsub.f32 %v1127, %v1131
      %v1136 = vsub.f32 %v1128, %v1134
      %v1137 = vmul.f32 %v1135, 1.442695
      %v1138 = vpow.pop %v1137
      %v1139 = vmul.f32 %v1136, 1.442695
      %v1140 = vpow.pop %v1139
      %v1141 = vsel %vm801, %v1138, 0.0
      %1142 = vadd.xlane.f32.xlu0 %v1141
      %v1143 = vpop.xlane.xlu0 %1142
      %v1144 = vsel %vm801, %v1140, 0.0
      %1145 = vadd.xlane.f32.xlu0 %v1144
      %v1146 = vpop.xlane.xlu0 %1145
      %v1147 = vrcp.pop %v1143
      %v1148 = vrcp.pop %v1146
      %v1149 = vmul.f32 %v1138, %v1147
      %v1150 = vmul.f32 %v1140, %v1148
      %1151 = vrot.lane.b32.xlu0 %v789, 48
      %v1152 = vpop.permute.xlu0 %1151
      %v1155 = vsel %vm801, %v1149, 0
      %1157 = vmatpush.msra.mxu0 0.0
      %1158 = vmatpush.msra.mxu0 0.0
      %1159 = vmatpush.msra.mxu0 0.0
      %1160 = vmatpush.msra.mxu0 0.0
      %1161 = vmatpush.msra.mxu0 0.0
      %1162 = vmatpush.msra.mxu0 0.0
      %1163 = vmatpush.msra.mxu0 0.0
      %1164 = vmatpush.msra.mxu0 0.0
      %1165 = vmatpush.msra.mxu0 0.0
      %1166 = vmatpush.msra.mxu0 0.0
      %1167 = vmatpush.msra.mxu0 0.0
      %1168 = vmatpush.msra.mxu0 0.0
      %1169 = vmatpush.msra.mxu0 0.0
      %1170 = vmatpush.msra.mxu0 0.0
      %1171 = vmatpush.msra.mxu0 0.0
      %1172 = vmatpush.msra.mxu0 %v1152
      %1173 = vmatmul.f32.gmra.mxu0 %v1155
      %v1174 = vpop.f32.mrf.mxu0
      %v1175 = vadd.f32 0.0, %v1174
      %1176 = vdwg.mxu0
      %1177 = vrot.lane.b32.xlu0 %v791, 48
      %v1178 = vpop.permute.xlu0 %1177
      %v1181 = vsel %vm801, %v1150, 0
      %1183 = vmatpush.msra.mxu0 0.0
      %1184 = vmatpush.msra.mxu0 0.0
      %1185 = vmatpush.msra.mxu0 0.0
      %1186 = vmatpush.msra.mxu0 0.0
      %1187 = vmatpush.msra.mxu0 0.0
      %1188 = vmatpush.msra.mxu0 0.0
      %1189 = vmatpush.msra.mxu0 0.0
      %1190 = vmatpush.msra.mxu0 0.0
      %1191 = vmatpush.msra.mxu0 0.0
      %1192 = vmatpush.msra.mxu0 0.0
      %1193 = vmatpush.msra.mxu0 0.0
      %1194 = vmatpush.msra.mxu0 0.0
      %1195 = vmatpush.msra.mxu0 0.0
      %1196 = vmatpush.msra.mxu0 0.0
      %1197 = vmatpush.msra.mxu0 0.0
      %1198 = vmatpush.msra.mxu0 %v1178
      %1199 = vmatmul.f32.gmra.mxu0 %v1181
      %v1200 = vpop.f32.mrf.mxu0
      %v1201 = vadd.f32 0.0, %v1200
      %1202 = vdwg.mxu0
      %1203 = vrot.lane.b32.xlu0 %v789, 104
      %v1204 = vpop.permute.xlu0 %1203
      %1205 = vrot.lane.b32.xlu0 %v789, 72
      %v1206 = vpop.permute.xlu0 %1205
      %v1207 = vsel %vm801, %v1204, 0
      %v1209 = vsel %vm801, %v1206, 0
      %1211 = vmatpush.xpose.msra.mxu0 0.0
      %1212 = vmatpush.xpose.msra.mxu0 0.0
      %1213 = vmatpush.xpose.msra.mxu0 0.0
      %1214 = vmatpush.xpose.msra.mxu0 0.0
      %1215 = vmatpush.xpose.msra.mxu0 0.0
      %1216 = vmatpush.xpose.msra.mxu0 0.0
      %1217 = vmatpush.xpose.msra.mxu0 0.0
      %1218 = vmatpush.xpose.msra.mxu0 0.0
      %1219 = vmatpush.xpose.msra.mxu0 0.0
      %1220 = vmatpush.xpose.msra.mxu0 0.0
      %1221 = vmatpush.xpose.msra.mxu0 0.0
      %1222 = vmatpush.xpose.msra.mxu0 0.0
      %1223 = vmatpush.xpose.msra.mxu0 0.0
      %1224 = vmatpush.xpose.msra.mxu0 0.0
      %1225 = vmatpush.xpose.msra.mxu0 0.0
      %1226 = vmatpush.xpose.msra.mxu0 %v1209
      %1227 = vmatmul.f32.gmra.mxu0 %v1207
      %v1228 = vpop.f32.mrf.mxu0
      %v1229 = vadd.f32 0.0, %v1228
      %1230 = vdwg.mxu0
      %1231 = vrot.lane.b32.xlu0 %v791, 104
      %v1232 = vpop.permute.xlu0 %1231
      %1233 = vrot.lane.b32.xlu0 %v791, 72
      %v1234 = vpop.permute.xlu0 %1233
      %v1235 = vsel %vm801, %v1232, 0
      %v1237 = vsel %vm801, %v1234, 0
      %1239 = vmatpush.xpose.msra.mxu0 0.0
      %1240 = vmatpush.xpose.msra.mxu0 0.0
      %1241 = vmatpush.xpose.msra.mxu0 0.0
      %1242 = vmatpush.xpose.msra.mxu0 0.0
      %1243 = vmatpush.xpose.msra.mxu0 0.0
      %1244 = vmatpush.xpose.msra.mxu0 0.0
      %1245 = vmatpush.xpose.msra.mxu0 0.0
      %1246 = vmatpush.xpose.msra.mxu0 0.0
      %1247 = vmatpush.xpose.msra.mxu0 0.0
      %1248 = vmatpush.xpose.msra.mxu0 0.0
      %1249 = vmatpush.xpose.msra.mxu0 0.0
      %1250 = vmatpush.xpose.msra.mxu0 0.0
      %1251 = vmatpush.xpose.msra.mxu0 0.0
      %1252 = vmatpush.xpose.msra.mxu0 0.0
      %1253 = vmatpush.xpose.msra.mxu0 0.0
      %1254 = vmatpush.xpose.msra.mxu0 %v1237
      %1255 = vmatmul.f32.gmra.mxu0 %v1235
      %v1256 = vpop.f32.mrf.mxu0
      %v1257 = vadd.f32 0.0, %v1256
      %1258 = vdwg.mxu0
      %v1259 = vmul.f32 %v1229, 0.35355338
      %v1260 = vmul.f32 %v1257, 0.35355338
      %v1261 = vadd.f32 %v1259, %v855
      %v1262 = vadd.f32 %v1260, %v856
      %v1263 = vsel %vm801, %v1261, -inf
      %1264 = vmax.xlane.f32.xlu0 %v1263
      %v1265 = vpop.xlane.xlu0 %1264
      %v1266 = vsel %vm801, %v1262, -inf
      %1267 = vmax.xlane.f32.xlu0 %v1266
      %v1268 = vpop.xlane.xlu0 %1267
      %v1269 = vsub.f32 %v1261, %v1265
      %v1270 = vsub.f32 %v1262, %v1268
      %v1271 = vmul.f32 %v1269, 1.442695
      %v1272 = vpow.pop %v1271
      %v1273 = vmul.f32 %v1270, 1.442695
      %v1274 = vpow.pop %v1273
      %v1275 = vsel %vm801, %v1272, 0.0
      %1276 = vadd.xlane.f32.xlu0 %v1275
      %v1277 = vpop.xlane.xlu0 %1276
      %v1278 = vsel %vm801, %v1274, 0.0
      %1279 = vadd.xlane.f32.xlu0 %v1278
      %v1280 = vpop.xlane.xlu0 %1279
      %v1281 = vrcp.pop %v1277
      %v1282 = vrcp.pop %v1280
      %v1283 = vmul.f32 %v1272, %v1281
      %v1284 = vmul.f32 %v1274, %v1282
      %1285 = vrot.lane.b32.xlu0 %v789, 40
      %v1286 = vpop.permute.xlu0 %1285
      %v1289 = vsel %vm801, %v1283, 0
      %1291 = vmatpush.msra.mxu0 0.0
      %1292 = vmatpush.msra.mxu0 0.0
      %1293 = vmatpush.msra.mxu0 0.0
      %1294 = vmatpush.msra.mxu0 0.0
      %1295 = vmatpush.msra.mxu0 0.0
      %1296 = vmatpush.msra.mxu0 0.0
      %1297 = vmatpush.msra.mxu0 0.0
      %1298 = vmatpush.msra.mxu0 0.0
      %1299 = vmatpush.msra.mxu0 0.0
      %1300 = vmatpush.msra.mxu0 0.0
      %1301 = vmatpush.msra.mxu0 0.0
      %1302 = vmatpush.msra.mxu0 0.0
      %1303 = vmatpush.msra.mxu0 0.0
      %1304 = vmatpush.msra.mxu0 0.0
      %1305 = vmatpush.msra.mxu0 0.0
      %1306 = vmatpush.msra.mxu0 %v1286
      %1307 = vmatmul.f32.gmra.mxu0 %v1289
      %v1308 = vpop.f32.mrf.mxu0
      %v1309 = vadd.f32 0.0, %v1308
      %1310 = vdwg.mxu0
      %1311 = vrot.lane.b32.xlu0 %v791, 40
      %v1312 = vpop.permute.xlu0 %1311
      %v1315 = vsel %vm801, %v1284, 0
      %1317 = vmatpush.msra.mxu0 0.0
      %1318 = vmatpush.msra.mxu0 0.0
      %1319 = vmatpush.msra.mxu0 0.0
      %1320 = vmatpush.msra.mxu0 0.0
      %1321 = vmatpush.msra.mxu0 0.0
      %1322 = vmatpush.msra.mxu0 0.0
      %1323 = vmatpush.msra.mxu0 0.0
      %1324 = vmatpush.msra.mxu0 0.0
      %1325 = vmatpush.msra.mxu0 0.0
      %1326 = vmatpush.msra.mxu0 0.0
      %1327 = vmatpush.msra.mxu0 0.0
      %1328 = vmatpush.msra.mxu0 0.0
      %1329 = vmatpush.msra.mxu0 0.0
      %1330 = vmatpush.msra.mxu0 0.0
      %1331 = vmatpush.msra.mxu0 0.0
      %1332 = vmatpush.msra.mxu0 %v1312
      %1333 = vmatmul.f32.gmra.mxu0 %v1315
      %v1334 = vpop.f32.mrf.mxu0
      %v1335 = vadd.f32 0.0, %v1334
      %1336 = vdwg.mxu0
      %1339 = vrot.lane.b32.xlu0 %v1041, 8
      %v1340 = vpop.permute.xlu0 %1339
      %1341 = vrot.lane.b32.xlu0 %v1067, 8
      %v1342 = vpop.permute.xlu0 %1341
      %1347 = vrot.lane.b32.xlu0 %v1175, 16
      %v1348 = vpop.permute.xlu0 %1347
      %1349 = vrot.lane.b32.xlu0 %v1201, 16
      %v1350 = vpop.permute.xlu0 %1349
      %1355 = vrot.lane.b32.xlu0 %v1309, 24
      %v1356 = vpop.permute.xlu0 %1355
      %1357 = vrot.lane.b32.xlu0 %v1335, 24
      %v1358 = vpop.permute.xlu0 %1357
      %v1361 = vsel %vm801, %v907, %v1340
      %v1362 = vsel %vm801, %v933, %v1342
      %vm1363 = vcmask 130048
      %v1364 = vsel %vm1363, %v1361, %v1348
      %v1365 = vsel %vm1363, %v1362, %v1350
      %vm1366 = vcmask 195584
      %v1367 = vsel %vm1366, %v1364, %v1356
      %v1368 = vsel %vm1366, %v1365, %v1358
      %v1369 = vpack.c.bf16 %v1368, %v1367
      %v1370 = vld [vmem:[%s647] sm:$0xf]
      %v1371 = vld [vmem:[%s647 + $0x4] sm:$0xf]
      %v1372 = vld [vmem:[%s647 + $0x8] sm:$0xf]
      %v1373 = vld [vmem:[%s647 + $0xc] sm:$0xf]
      %v1374 = vld [vmem:[%s650] sm:$0x1]
      %v1376 = vperm.slane %v1374, 0
      %v1382 = vunpack.c.l.b16 %v1370
      %v1383 = vunpack.c.l.b16 %v1371
      %v1384 = vunpack.c.l.b16 %v1372
      %v1385 = vunpack.c.l.b16 %v1373
      %v1386 = vpack.c.b16 %v1383, %v1382
      %v1387 = vpack.c.b16 %v1385, %v1384
      %v1391 = vsel %vm775, %v1369, 0
      %1393 = vmatpush.bf16.msra.mxu0 0
      %1394 = vmatpush.bf16.msra.mxu0 0
      %1395 = vmatpush.bf16.msra.mxu0 0
      %1396 = vmatpush.bf16.msra.mxu0 0
      %1397 = vmatpush.bf16.msra.mxu0 0
      %1398 = vmatpush.bf16.msra.mxu0 0
      %1399 = vmatpush.bf16.msra.mxu0 %v1387
      %1400 = vmatpush.bf16.msra.mxu0 %v1386
      %1401 = vmatmul.bf16.gmra.mxu0 %v1391
      %v1402 = vpop.f32.mrf.mxu0
      %v1403 = vadd.f32 %v1376, %v1402
      %v1404 = vpop.f32.mrf.mxu0
      %v1405 = vadd.f32 %v1376, %v1404
      %1406 = vdwg.mxu0
      %v1407 = vadd.f32 %v1403, %v752
      %v1408 = vadd.f32 %v1405, %v753
      %v1409 = vld [vmem:[%s653] sm:$0x1]
      %v1410 = vld [vmem:[%s656] sm:$0x1]
      %v1411 = vsel %vm775, %v1407, 0.0
      %1412 = vadd.xlane.f32.xlu0 %v1411
      %v1413 = vpop.xlane.xlu0 %1412
      %v1414 = vsel %vm775, %v1408, 0.0
      %1415 = vadd.xlane.f32.xlu0 %v1414
      %v1416 = vpop.xlane.xlu0 %1415
      %v1417 = vrcp.pop 32.0
      %v1418 = vmul.f32 32.0, %v1417
      %v1419 = vsub.f32 1.0, %v1418
      %v1420 = vmul.f32 %v1417, %v1419
      %v1421 = vadd.f32 %v1417, %v1420
      %vm1422 = vweird.f32 %v1417
      %v1423 = vsel %vm1422, %v1417, %v1421
      %v1424 = vmul.f32 %v1413, %v1423
      %v1425 = vmul.f32 %v1416, %v1423
      %v1426 = vsub.f32 %v1407, %v1424
      %v1427 = vsub.f32 %v1408, %v1425
      %v1428 = vmul.f32 %v1426, %v1426
      %v1429 = vmul.f32 %v1427, %v1427
      %v1430 = vsel %vm775, %v1428, 0.0
      %1431 = vadd.xlane.f32.xlu0 %v1430
      %v1432 = vpop.xlane.xlu0 %1431
      %v1433 = vsel %vm775, %v1429, 0.0
      %1434 = vadd.xlane.f32.xlu0 %v1433
      %v1435 = vpop.xlane.xlu0 %1434
      %v1436 = vmul.f32 %v1432, %v1423
      %v1437 = vmul.f32 %v1435, %v1423
      %v1438 = vadd.f32 %v1436, 1e-12
      %v1439 = vadd.f32 %v1437, 1e-12
      %v1440 = vrsqrt.pop %v1438
      %v1441 = vmul.f32 %v1440, %v1438
      %v1442 = vmul.f32 %v1441, %v1440
      %v1443 = vmul.f32 0.5, %v1442
      %v1444 = vsub.f32 1.5, %v1443
      %v1445 = vmul.f32 %v1440, %v1444
      %vm1446 = vweird.f32 %v1438
      %vm1447 = vweird.f32 %v1440
      %vm1448 = vmor %vm1446, %vm1447
      %v1449 = vsel %vm1448, %v1440, %v1445
      %v1450 = vrsqrt.pop %v1439
      %v1451 = vmul.f32 %v1450, %v1439
      %v1452 = vmul.f32 %v1451, %v1450
      %v1453 = vmul.f32 0.5, %v1452
      %v1454 = vsub.f32 1.5, %v1453
      %v1455 = vmul.f32 %v1450, %v1454
      %vm1456 = vweird.f32 %v1439
      %vm1457 = vweird.f32 %v1450
      %vm1458 = vmor %vm1456, %vm1457
      %v1459 = vsel %vm1458, %v1450, %v1455
      %v1460 = vmul.f32 %v1426, %v1449
      %v1461 = vmul.f32 %v1427, %v1459
      %v1463 = vperm.slane %v1409, 0
      %v1465 = vmul.f32 %v1460, %v1463
      %v1466 = vmul.f32 %v1461, %v1463
      %v1468 = vperm.slane %v1410, 0
      %v1470 = vadd.f32 %v1465, %v1468
      %v1471 = vadd.f32 %v1466, %v1468
      %v1472 = vpack.c.bf16 %v1471, %v1470
      %v1473 = vld [vmem:[%s661] sm:$0xf]
      %v1474 = vld [vmem:[%s661 + $0x4] sm:$0xf]
      %v1475 = vld [vmem:[%s661 + $0x8] sm:$0xf]
      %v1476 = vld [vmem:[%s661 + $0xc] sm:$0xf]
      %v1477 = vld [vmem:[%s664] sm:$0x1]
      %v1479 = vperm.slane %v1477, 0
      %v1485 = vunpack.c.l.b16 %v1473
      %v1486 = vunpack.c.l.b16 %v1474
      %v1487 = vunpack.c.l.b16 %v1475
      %v1488 = vunpack.c.l.b16 %v1476
      %v1489 = vpack.c.b16 %v1486, %v1485
      %v1490 = vpack.c.b16 %v1488, %v1487
      %v1494 = vsel %vm775, %v1472, 0
      %1496 = vmatpush.bf16.msra.mxu0 0
      %1497 = vmatpush.bf16.msra.mxu0 0
      %1498 = vmatpush.bf16.msra.mxu0 0
      %1499 = vmatpush.bf16.msra.mxu0 0
      %1500 = vmatpush.bf16.msra.mxu0 0
      %1501 = vmatpush.bf16.msra.mxu0 0
      %1502 = vmatpush.bf16.msra.mxu0 %v1490
      %1503 = vmatpush.bf16.msra.mxu0 %v1489
      %1504 = vmatmul.bf16.gmra.mxu0 %v1494
      %v1505 = vpop.f32.mrf.mxu0
      %v1506 = vadd.f32 %v1479, %v1505
      %v1507 = vpop.f32.mrf.mxu0
      %v1508 = vadd.f32 %v1479, %v1507
      %1509 = vdwg.mxu0
      %v1510 = vmul.f32 %v1506, 0.5
      %v1511 = vmul.f32 %v1508, 0.5
      %v1512 = vmul.f32 %v1506, 0.044715
      %v1513 = vmul.f32 %v1508, 0.044715
      %v1514 = vmul.f32 %v1512, %v1506
      %v1515 = vmul.f32 %v1513, %v1508
      %v1516 = vmul.f32 %v1514, %v1506
      %v1517 = vmul.f32 %v1515, %v1508
      %v1518 = vadd.f32 %v1506, %v1516
      %v1519 = vadd.f32 %v1508, %v1517
      %v1520 = vmul.f32 %v1518, 0.7978846
      %v1521 = vmul.f32 %v1519, 0.7978846
      %v1522 = vtanh.pop %v1520
      %v1523 = vtanh.pop %v1521
      %v1524 = vadd.f32 %v1522, 1.0
      %v1525 = vadd.f32 %v1523, 1.0
      %v1526 = vmul.f32 %v1510, %v1524
      %v1527 = vmul.f32 %v1511, %v1525
      %v1528 = vpack.c.bf16 %v1527, %v1526
      %v1529 = vld [vmem:[%s669] sm:$0xf]
      %v1530 = vld [vmem:[%s669 + $0x4] sm:$0xf]
      %v1531 = vld [vmem:[%s669 + $0x8] sm:$0xf]
      %v1532 = vld [vmem:[%s669 + $0xc] sm:$0xf]
      %v1533 = vld [vmem:[%s669 + $0x10] sm:$0xf]
      %v1534 = vld [vmem:[%s669 + $0x14] sm:$0xf]
      %v1535 = vld [vmem:[%s669 + $0x18] sm:$0xf]
      %v1536 = vld [vmem:[%s669 + $0x1c] sm:$0xf]
      %v1537 = vld [vmem:[%s669 + $0x20] sm:$0xf]
      %v1538 = vld [vmem:[%s669 + $0x24] sm:$0xf]
      %v1539 = vld [vmem:[%s669 + $0x28] sm:$0xf]
      %v1540 = vld [vmem:[%s669 + $0x2c] sm:$0xf]
      %v1541 = vld [vmem:[%s669 + $0x30] sm:$0xf]
      %v1542 = vld [vmem:[%s669 + $0x34] sm:$0xf]
      %v1543 = vld [vmem:[%s669 + $0x38] sm:$0xf]
      %v1544 = vld [vmem:[%s669 + $0x3c] sm:$0xf]
      %v1545 = vld [vmem:[%s672] sm:$0x1]
      %v1547 = vperm.slane %v1545, 0
      %v1565 = vunpack.c.l.b16 %v1529
      %v1566 = vunpack.c.l.b16 %v1530
      %v1567 = vunpack.c.l.b16 %v1531
      %v1568 = vunpack.c.l.b16 %v1532
      %v1569 = vunpack.c.l.b16 %v1533
      %v1570 = vunpack.c.l.b16 %v1534
      %v1571 = vunpack.c.l.b16 %v1535
      %v1572 = vunpack.c.l.b16 %v1536
      %v1573 = vunpack.c.l.b16 %v1537
      %v1574 = vunpack.c.l.b16 %v1538
      %v1575 = vunpack.c.l.b16 %v1539
      %v1576 = vunpack.c.l.b16 %v1540
      %v1577 = vunpack.c.l.b16 %v1541
      %v1578 = vunpack.c.l.b16 %v1542
      %v1579 = vunpack.c.l.b16 %v1543
      %v1580 = vunpack.c.l.b16 %v1544
      %v1581 = vpack.c.b16 %v1566, %v1565
      %v1582 = vpack.c.b16 %v1568, %v1567
      %v1583 = vpack.c.b16 %v1570, %v1569
      %v1584 = vpack.c.b16 %v1572, %v1571
      %v1585 = vpack.c.b16 %v1574, %v1573
      %v1586 = vpack.c.b16 %v1576, %v1575
      %v1587 = vpack.c.b16 %v1578, %v1577
      %v1588 = vpack.c.b16 %v1580, %v1579
      %1597 = vmatpush.bf16.msra.mxu0 %v1588
      %1598 = vmatpush.bf16.msra.mxu0 %v1587
      %1599 = vmatpush.bf16.msra.mxu0 %v1586
      %1600 = vmatpush.bf16.msra.mxu0 %v1585
      %1601 = vmatpush.bf16.msra.mxu0 %v1584
      %1602 = vmatpush.bf16.msra.mxu0 %v1583
      %1603 = vmatpush.bf16.msra.mxu0 %v1582
      %1604 = vmatpush.bf16.msra.mxu0 %v1581
      %1605 = vmatmul.bf16.gmra.mxu0 %v1528
      %v1606 = vpop.f32.mrf.mxu0
      %v1607 = vadd.f32 %v1547, %v1606
      %v1608 = vpop.f32.mrf.mxu0
      %v1609 = vadd.f32 %v1547, %v1608
      %1610 = vdwg.mxu0
      %v1611 = vadd.f32 %v1607, %v1470
      %v1612 = vadd.f32 %v1609, %v1471
      %v1613 = vld [vmem:[%s675] sm:$0x1]
      %v1614 = vld [vmem:[%s678] sm:$0x1]
      %v1615 = vsel %vm775, %v1611, 0.0
      %1616 = vadd.xlane.f32.xlu0 %v1615
      %v1617 = vpop.xlane.xlu0 %1616
      %v1618 = vsel %vm775, %v1612, 0.0
      %1619 = vadd.xlane.f32.xlu0 %v1618
      %v1620 = vpop.xlane.xlu0 %1619
      %v1621 = vmul.f32 %v1617, %v1423
      %v1622 = vmul.f32 %v1620, %v1423
      %v1623 = vsub.f32 %v1611, %v1621
      %v1624 = vsub.f32 %v1612, %v1622
      %v1625 = vmul.f32 %v1623, %v1623
      %v1626 = vmul.f32 %v1624, %v1624
      %v1627 = vsel %vm775, %v1625, 0.0
      %1628 = vadd.xlane.f32.xlu0 %v1627
      %v1629 = vpop.xlane.xlu0 %1628
      %v1630 = vsel %vm775, %v1626, 0.0
      %1631 = vadd.xlane.f32.xlu0 %v1630
      %v1632 = vpop.xlane.xlu0 %1631
      %v1633 = vmul.f32 %v1629, %v1423
      %v1634 = vmul.f32 %v1632, %v1423
      %v1635 = vadd.f32 %v1633, 1e-12
      %v1636 = vadd.f32 %v1634, 1e-12
      %v1637 = vrsqrt.pop %v1635
      %v1638 = vmul.f32 %v1637, %v1635
      %v1639 = vmul.f32 %v1638, %v1637
      %v1640 = vmul.f32 0.5, %v1639
      %v1641 = vsub.f32 1.5, %v1640
      %v1642 = vmul.f32 %v1637, %v1641
      %vm1643 = vweird.f32 %v1635
      %vm1644 = vweird.f32 %v1637
      %vm1645 = vmor %vm1643, %vm1644
      %v1646 = vsel %vm1645, %v1637, %v1642
      %v1647 = vrsqrt.pop %v1636
      %v1648 = vmul.f32 %v1647, %v1636
      %v1649 = vmul.f32 %v1648, %v1647
      %v1650 = vmul.f32 0.5, %v1649
      %v1651 = vsub.f32 1.5, %v1650
      %v1652 = vmul.f32 %v1647, %v1651
      %vm1653 = vweird.f32 %v1636
      %vm1654 = vweird.f32 %v1647
      %vm1655 = vmor %vm1653, %vm1654
      %v1656 = vsel %vm1655, %v1647, %v1652
      %v1657 = vmul.f32 %v1623, %v1646
      %v1658 = vmul.f32 %v1624, %v1656
      %v1660 = vperm.slane %v1613, 0
      %v1662 = vmul.f32 %v1657, %v1660
      %v1663 = vmul.f32 %v1658, %v1660
      %v1665 = vperm.slane %v1614, 0
      %v1667 = vadd.f32 %v1662, %v1665
      %v1668 = vadd.f32 %v1663, %v1665
      %1669 = vst.msk [vmem:[%s16] sm:$0xff] %vm775, %v1667
      %1670 = vst.msk [vmem:[%s16 + $0x8] sm:$0xff] %vm775, %v1668
      // Predicated region
      $region89: #{custom_bert_forward.2} parent=83 // pred_check
        %p1671 = pneg %p436
      $region90: #{custom_bert_forward.2} parent=83 // pred_check_branch
        %1673 = sbr.rel (%p1671) target = $region92
      $region91: #{custom_bert_forward.2} parent=83 // pred_region
        _
      $region92: #{custom_bert_forward.2} parent=83 // pred_fallthru
        _
      // Predicated region
      $region93: #{custom_bert_forward.2} parent=83 // pred_check
        %p1674 = pneg %p436
      $region94: #{custom_bert_forward.2} parent=83 // pred_check_branch
        %1676 = sbr.rel (%p1674) target = $region96
      $region95: #{custom_bert_forward.2} parent=83 // pred_region
        _
      $region96: #{custom_bert_forward.2} parent=83 // pred_fallthru
        _
    $region84: #{custom_bert_forward.2} parent=5 // pred_fallthru
      _
    %p1677 = scmp.le.s32.totalorder 2, %s22
    // Predicated region
    $region97: #{custom_bert_forward.2} parent=5 // pred_check
      %p1678 = pneg %p1677
    $region98: #{custom_bert_forward.2} parent=5 // pred_check_branch
      %1680 = sbr.rel (%p1678) target = $region100
    $region99: #{custom_bert_forward.2} parent=5 // pred_region
      %s1681 = ssub.s32 %s22, 2
    $region100: #{custom_bert_forward.2} parent=5 // pred_fallthru
      _
  $region6: #{custom_bert_forward.2} parent=0 // loop_footer
    %s26 = sadd.s32 1, %s22
  $region7: #{custom_bert_forward.2} parent=0 // loop_footer_branch
    %21 = sbr.rel target = $region3
  $region8: #{custom_bert_forward.2} parent=0 // loop_exit
    _

</llo_original>
